<compile_context>
chip_gen: v5e
topology: v5e:2x2
jax: 0.10.0
libtpu: 0.0.40
codegen_flags: <defaults>
</compile_context>

<pallas_src>
import numpy as np
import jax
import jax.numpy as jnp
from jax import lax
from jax.experimental import pallas as pl
from jax.experimental.pallas import tpu as pltpu


# -----------------------------------------------------------------------------
# Fused Pallas kernel: per-batch partial sums for both loss terms
# -----------------------------------------------------------------------------
def _make_loss_kernel(n_frames, n_ch, h, w):
    """Builds the fused kernel for one batch element.

    Kernel refs:
      pred_i_ref : (N, C, H, W)  burst predictions (LossAnneal operand)
      pred_ref   : (C, H, W)     fused prediction  (LossBasic operand)
      gt_ref     : (C, H, W)     ground truth (DMA'd once per batch element)
      sqb/grb/sqa/gra_ref : (1, 1) per-batch partial sums:
          sqb = sum((pred - gt)^2)            grb = sum(|grad(pred) - grad(gt)|)
          sqa = sum_n sum((pred_n - gt)^2)    gra = sum_n sum(|grad(pred_n)-grad(gt)|)
    """
    # pltpu.roll wants tile-aligned vreg dims; otherwise shift via slice+concat
    # (still fully in-kernel -- no HBM padding pass in either case).
    use_roll = (h % 8 == 0) and (w % 128 == 0)

    def kernel(pred_i_ref, pred_ref, gt_ref, sqb_ref, grb_ref, sqa_ref, gra_ref):
        f32 = jnp.float32

        if use_roll:
            # Hoisted once per grid step (JAX does not CSE broadcast_in_dim).
            row0 = lax.broadcasted_iota(jnp.int32, (h, w), 0) == 0
            col0 = lax.broadcasted_iota(jnp.int32, (h, w), 1) == 0
            zero_hw = jnp.zeros((h, w), f32)

        def grad_l1(x):
            # TensorGradient(L1=True): |x[i,j-1]-x[i,j]| + |x[i-1,j]-x[i,j]|,
            # with out-of-range neighbours treated as 0 (PyTorch pad-then-slice).
            if use_roll:
                left = jnp.where(col0, zero_hw, pltpu.roll(x, 1, axis=1))  # x[i, j-1]
                up = jnp.where(row0, zero_hw, pltpu.roll(x, 1, axis=0))    # x[i-1, j]
            else:
                left = jnp.concatenate(
                    [jnp.zeros((h, 1), f32), x[:, : w - 1]], axis=1)
                up = jnp.concatenate(
                    [jnp.zeros((1, w), f32), x[: h - 1, :]], axis=0)
            return jnp.abs(left - x) + jnp.abs(up - x)

        # Ground truth and its gradient: computed once, reused by all N+1 images.
        gt = gt_ref[...].astype(f32)                      # (C, H, W)
        gt_ch = [gt[c] for c in range(n_ch)]
        g_gt = [grad_l1(gt_ch[c]) for c in range(n_ch)]

        def accum_image(img_chw, sq_acc, gr_acc):
            # Element-wise partial sums only; the cross-lane reduce happens once,
            # at the very end of the kernel.
            for c in range(n_ch):
                d = img_chw[c] - gt_ch[c]
                sq_acc = sq_acc + d * d
                gr_acc = gr_acc + jnp.abs(grad_l1(img_chw[c]) - g_gt[c])
            return sq_acc, gr_acc

        zeros_hw = jnp.zeros((h, w), f32)

        # ---- LossBasic image --------------------------------------------------
        sq_b, gr_b = accum_image(pred_ref[...].astype(f32), zeros_hw, zeros_hw)

        # ---- LossAnneal burst frames (reuse gt / grad(gt) from above) ----------
        def frame_body(i, carry):
            sq_acc, gr_acc = carry
            return accum_image(pred_i_ref[i].astype(f32), sq_acc, gr_acc)

        sq_a, gr_a = lax.fori_loop(0, n_frames, frame_body,
                                   (zeros_hw, zeros_hw), unroll=True)

        zero11 = jnp.zeros((1, 1), f32)
        sqb_ref[...] = zero11 + jnp.sum(sq_b)
        grb_ref[...] = zero11 + jnp.sum(gr_b)
        sqa_ref[...] = zero11 + jnp.sum(sq_a)
        gra_ref[...] = zero11 + jnp.sum(gr_a)

    return kernel


def _fused_loss_sums(pred_img_i, pred_img, ground_truth):
    """Returns four f32 scalars (summed over the batch):
    sq_basic, gr_basic, sq_anneal (summed over N frames), gr_anneal."""
    B, N, C, H, W = pred_img_i.shape
    assert pred_img.shape == (B, C, H, W)
    assert ground_truth.shape == (B, C, H, W)

    kernel = _make_loss_kernel(N, C, H, W)

    # Only raise the scoped-VMEM limit when big frames would actually exceed the
    # default (double-buffered inputs + f32 working set).
    itemsize = max(jnp.dtype(pred_img_i.dtype).itemsize,
                   jnp.dtype(ground_truth.dtype).itemsize)
    block_bytes = (N + 2) * C * H * W * itemsize
    vmem_need = 2 * block_bytes + 8 * H * W * 4 + (2 << 20)
    cp = dict(dimension_semantics=("parallel",))
    if vmem_need > (16 << 20):
        # TODO(synk): for very large frames, additionally tile H across the grid
        # (halo row fetched per tile) instead of only raising the VMEM limit.
        cp["vmem_limit_bytes"] = int(min(vmem_need, 100 << 20))

    out_shape = [jax.ShapeDtypeStruct((B, 1, 1), jnp.float32) for _ in range(4)]
    out_specs = [pl.BlockSpec((None, 1, 1), lambda b: (b, 0, 0)) for _ in range(4)]

    sqb, grb, sqa, gra = pl.pallas_call(
        kernel,
        grid_spec=pltpu.PrefetchScalarGridSpec(
            num_scalar_prefetch=0,
            grid=(B,),
            in_specs=[
                # whole burst for this batch element
                pl.BlockSpec((None, N, C, H, W), lambda b: (b, 0, 0, 0, 0)),
                # fused prediction (LossBasic operand)
                pl.BlockSpec((None, C, H, W), lambda b: (b, 0, 0, 0)),
                # ground truth: fetched once per batch element, shared by all terms
                pl.BlockSpec((None, C, H, W), lambda b: (b, 0, 0, 0)),
            ],
            out_specs=out_specs,
        ),
        out_shape=out_shape,
        compiler_params=pltpu.CompilerParams(**cp),
    )(pred_img_i, pred_img, ground_truth)

    # Per-batch partials summed here: keeps f32 accumulation bounded and lets the
    # B grid axis run "parallel" on multi-TensorCore chips.
    return jnp.sum(sqb), jnp.sum(grb), jnp.sum(sqa), jnp.sum(gra)


# -----------------------------------------------------------------------------
# LossFunc forward (matches the PyTorch module semantics)
# -----------------------------------------------------------------------------
def loss_func_forward(pred_img_i, pred_img, ground_truth, global_step,
                      coeff_basic=1.0, coeff_anneal=1.0,
                      alpha=0.9998, beta=100.0):
    """LossFunc.forward: returns (coeff_basic*LossBasic, coeff_anneal*LossAnneal)."""
    sq_b, gr_b, sq_a, gr_a = _fused_loss_sums(pred_img_i, pred_img, ground_truth)

    # LossBasic = MSE(pred, gt) + L1(grad(pred), grad(gt)); both are means over
    # the same B*C*H*W elements.
    numel_basic = pred_img.size
    loss_basic = (sq_b + gr_b) / numel_basic

    # LossAnneal = beta * alpha**step * (1/N) * sum_i LossBasic(pred_i[:, i], gt).
    # NOTE: collapsing to (sq_a + gr_a) / pred_img_i.size is valid only because the
    # MSE and gradient-L1 terms share the same normalizer (B*C*H*W); revisit if
    # either term's normalization ever changes.
    numel_anneal = pred_img_i.size
    loss_anneal = beta * (alpha ** global_step) * (sq_a + gr_a) / numel_anneal

    return coeff_basic * loss_basic, coeff_anneal * loss_anneal


# -----------------------------------------------------------------------------
# Pure-JAX reference (mirrors the PyTorch module) for the correctness check
# -----------------------------------------------------------------------------
def _ref_gradient_l1(img):
    H, W = img.shape[-2], img.shape[-1]
    lead = [(0, 0)] * (img.ndim - 2)
    l = jnp.pad(img, lead + [(0, 0), (1, 0)])
    r = jnp.pad(img, lead + [(0, 0), (0, 1)])
    u = jnp.pad(img, lead + [(1, 0), (0, 0)])
    d = jnp.pad(img, lead + [(0, 1), (0, 0)])
    return jnp.abs((l - r)[..., :H, :W]) + jnp.abs((u - d)[..., :H, :W])


def _ref_loss_basic(pred, gt):
    return (jnp.mean((pred - gt) ** 2)
            + jnp.mean(jnp.abs(_ref_gradient_l1(pred) - _ref_gradient_l1(gt))))


def _ref_loss_func(pred_img_i, pred_img, gt, global_step,
                   coeff_basic=1.0, coeff_anneal=1.0, alpha=0.9998, beta=100.0):
    lb = _ref_loss_basic(pred_img, gt)
    n = pred_img_i.shape[1]
    la = 0.0
    for i in range(n):
        la = la + _ref_loss_basic(pred_img_i[:, i], gt)
    la = beta * (alpha ** global_step) * (la / n)
    return coeff_basic * lb, coeff_anneal * la


if __name__ == "__main__":
    key = jax.random.PRNGKey(0)
    k1, k2, k3 = jax.random.split(key, 3)

    # Small burst-denoising-like shapes; W=128 keeps the lane dim tile-aligned so
    # the pltpu.roll fast path is the one exercised.
    B, N, C, H, W = 2, 4, 3, 16, 128
    pred_img_i = jax.random.normal(k1, (B, N, C, H, W), jnp.float32)
    pred_img = jax.random.normal(k2, (B, C, H, W), jnp.float32)
    ground_truth = jax.random.normal(k3, (B, C, H, W), jnp.float32)
    global_step = 100

    fwd = jax.jit(loss_func_forward, static_argnums=(3,))
    basic, anneal = fwd(pred_img_i, pred_img, ground_truth, global_step)
    jax.block_until_ready((basic, anneal))

    ref_basic, ref_anneal = _ref_loss_func(pred_img_i, pred_img, ground_truth,
                                           global_step)
    np.testing.assert_allclose(np.asarray(basic), np.asarray(ref_basic),
                               rtol=2e-4, atol=1e-4)
    np.testing.assert_allclose(np.asarray(anneal), np.asarray(ref_anneal),
                               rtol=2e-4, atol=1e-3)
    print("KERNEL_OK")
</pallas_src>

<mosaic_0001>
module attributes {stable_mosaic.version = 11 : i64} {
  func.func @kernel(%arg0: i32, %arg1: memref<1x4x3x16x128xf32, #tpu.memory_space<vmem>>, %arg2: memref<1x3x16x128xf32, #tpu.memory_space<vmem>>, %arg3: memref<1x3x16x128xf32, #tpu.memory_space<vmem>>, %arg4: memref<1x1x1xf32, #tpu.memory_space<vmem>>, %arg5: memref<1x1x1xf32, #tpu.memory_space<vmem>>, %arg6: memref<1x1x1xf32, #tpu.memory_space<vmem>>, %arg7: memref<1x1x1xf32, #tpu.memory_space<vmem>>) attributes {dimension_semantics = [#tpu.dimension_semantics<parallel>], iteration_bounds = array<i64: 2>, scalar_prefetch = 0 : i64, scratch_operands = 0 : i64, tpu.core_type = #tpu.core_type<tc>, window_params = [{transform_indices = @transform_0, window_bounds = array<i64: 1, 4, 3, 16, 128>}, {transform_indices = @transform_1, window_bounds = array<i64: 1, 3, 16, 128>}, {transform_indices = @transform_2, window_bounds = array<i64: 1, 3, 16, 128>}, {transform_indices = @transform_3, window_bounds = array<i64: 1, 1, 1>}, {transform_indices = @transform_4, window_bounds = array<i64: 1, 1, 1>}, {transform_indices = @transform_5, window_bounds = array<i64: 1, 1, 1>}, {transform_indices = @transform_6, window_bounds = array<i64: 1, 1, 1>}]} {
    %0 = tpu.iota {dimensions = array<i32: 0>} : vector<16x128xi32>
    %c0_i32 = arith.constant 0 : i32
    %1 = vector.broadcast %c0_i32 : i32 to vector<16x128xi32>
    %2 = arith.cmpi eq, %0, %1 : vector<16x128xi32>
    %3 = tpu.iota {dimensions = array<i32: 1>} : vector<16x128xi32>
    %c0_i32_0 = arith.constant 0 : i32
    %4 = vector.broadcast %c0_i32_0 : i32 to vector<16x128xi32>
    %5 = arith.cmpi eq, %3, %4 : vector<16x128xi32>
    %cst = arith.constant 0.000000e+00 : f32
    %6 = vector.broadcast %cst : f32 to vector<16x128xf32>
    %c0 = arith.constant 0 : index
    %c0_1 = arith.constant 0 : index
    %c0_2 = arith.constant 0 : index
    %c0_3 = arith.constant 0 : index
    %7 = vector.load %arg3[%c0, %c0_1, %c0_2, %c0_3] : memref<1x3x16x128xf32, #tpu.memory_space<vmem>>, vector<1x3x16x128xf32>
    %8 = vector.shape_cast %7 : vector<1x3x16x128xf32> to vector<3x16x128xf32>
    %9 = vector.extract_strided_slice %8 {offsets = [0, 0, 0], sizes = [1, 16, 128], strides = [1, 1, 1]} : vector<3x16x128xf32> to vector<1x16x128xf32>
    %10 = vector.shape_cast %9 : vector<1x16x128xf32> to vector<16x128xf32>
    %11 = vector.extract_strided_slice %8 {offsets = [1, 0, 0], sizes = [1, 16, 128], strides = [1, 1, 1]} : vector<3x16x128xf32> to vector<1x16x128xf32>
    %12 = vector.shape_cast %11 : vector<1x16x128xf32> to vector<16x128xf32>
    %13 = vector.extract_strided_slice %8 {offsets = [2, 0, 0], sizes = [1, 16, 128], strides = [1, 1, 1]} : vector<3x16x128xf32> to vector<1x16x128xf32>
    %14 = vector.shape_cast %13 : vector<1x16x128xf32> to vector<16x128xf32>
    %c1_i32 = arith.constant 1 : i32
    %15 = tpu.dynamic_rotate %10 by %c1_i32 dim 1 : vector<16x128xf32>, i32 -> vector<16x128xf32>
    %16 = arith.select %5, %6, %15 : vector<16x128xi1>, vector<16x128xf32>
    %c1_i32_4 = arith.constant 1 : i32
    %17 = tpu.dynamic_rotate %10 by %c1_i32_4 dim 0 : vector<16x128xf32>, i32 -> vector<16x128xf32>
    %18 = arith.select %2, %6, %17 : vector<16x128xi1>, vector<16x128xf32>
    %19 = arith.subf %16, %10 : vector<16x128xf32>
    %20 = math.absf %19 : vector<16x128xf32>
    %21 = arith.subf %18, %10 : vector<16x128xf32>
    %22 = math.absf %21 : vector<16x128xf32>
    %23 = arith.addf %20, %22 : vector<16x128xf32>
    %c1_i32_5 = arith.constant 1 : i32
    %24 = tpu.dynamic_rotate %12 by %c1_i32_5 dim 1 : vector<16x128xf32>, i32 -> vector<16x128xf32>
    %25 = arith.select %5, %6, %24 : vector<16x128xi1>, vector<16x128xf32>
    %c1_i32_6 = arith.constant 1 : i32
    %26 = tpu.dynamic_rotate %12 by %c1_i32_6 dim 0 : vector<16x128xf32>, i32 -> vector<16x128xf32>
    %27 = arith.select %2, %6, %26 : vector<16x128xi1>, vector<16x128xf32>
    %28 = arith.subf %25, %12 : vector<16x128xf32>
    %29 = math.absf %28 : vector<16x128xf32>
    %30 = arith.subf %27, %12 : vector<16x128xf32>
    %31 = math.absf %30 : vector<16x128xf32>
    %32 = arith.addf %29, %31 : vector<16x128xf32>
    %c1_i32_7 = arith.constant 1 : i32
    %33 = tpu.dynamic_rotate %14 by %c1_i32_7 dim 1 : vector<16x128xf32>, i32 -> vector<16x128xf32>
    %34 = arith.select %5, %6, %33 : vector<16x128xi1>, vector<16x128xf32>
    %c1_i32_8 = arith.constant 1 : i32
    %35 = tpu.dynamic_rotate %14 by %c1_i32_8 dim 0 : vector<16x128xf32>, i32 -> vector<16x128xf32>
    %36 = arith.select %2, %6, %35 : vector<16x128xi1>, vector<16x128xf32>
    %37 = arith.subf %34, %14 : vector<16x128xf32>
    %38 = math.absf %37 : vector<16x128xf32>
    %39 = arith.subf %36, %14 : vector<16x128xf32>
    %40 = math.absf %39 : vector<16x128xf32>
    %41 = arith.addf %38, %40 : vector<16x128xf32>
    %cst_9 = arith.constant 0.000000e+00 : f32
    %42 = vector.broadcast %cst_9 : f32 to vector<16x128xf32>
    %c0_10 = arith.constant 0 : index
    %c0_11 = arith.constant 0 : index
    %c0_12 = arith.constant 0 : index
    %c0_13 = arith.constant 0 : index
    %43 = vector.load %arg2[%c0_10, %c0_11, %c0_12, %c0_13] : memref<1x3x16x128xf32, #tpu.memory_space<vmem>>, vector<1x3x16x128xf32>
    %44 = vector.shape_cast %43 : vector<1x3x16x128xf32> to vector<3x16x128xf32>
    %45 = vector.extract_strided_slice %44 {offsets = [0, 0, 0], sizes = [1, 16, 128], strides = [1, 1, 1]} : vector<3x16x128xf32> to vector<1x16x128xf32>
    %46 = vector.shape_cast %45 : vector<1x16x128xf32> to vector<16x128xf32>
    %47 = arith.subf %46, %10 : vector<16x128xf32>
    %48 = arith.mulf %47, %47 : vector<16x128xf32>
    %49 = arith.addf %42, %48 : vector<16x128xf32>
    %50 = vector.extract_strided_slice %44 {offsets = [0, 0, 0], sizes = [1, 16, 128], strides = [1, 1, 1]} : vector<3x16x128xf32> to vector<1x16x128xf32>
    %51 = vector.shape_cast %50 : vector<1x16x128xf32> to vector<16x128xf32>
    %c1_i32_14 = arith.constant 1 : i32
    %52 = tpu.dynamic_rotate %51 by %c1_i32_14 dim 1 : vector<16x128xf32>, i32 -> vector<16x128xf32>
    %53 = arith.select %5, %6, %52 : vector<16x128xi1>, vector<16x128xf32>
    %c1_i32_15 = arith.constant 1 : i32
    %54 = tpu.dynamic_rotate %51 by %c1_i32_15 dim 0 : vector<16x128xf32>, i32 -> vector<16x128xf32>
    %55 = arith.select %2, %6, %54 : vector<16x128xi1>, vector<16x128xf32>
    %56 = arith.subf %53, %51 : vector<16x128xf32>
    %57 = math.absf %56 : vector<16x128xf32>
    %58 = arith.subf %55, %51 : vector<16x128xf32>
    %59 = math.absf %58 : vector<16x128xf32>
    %60 = arith.addf %57, %59 : vector<16x128xf32>
    %61 = arith.subf %60, %23 : vector<16x128xf32>
    %62 = math.absf %61 : vector<16x128xf32>
    %63 = arith.addf %42, %62 : vector<16x128xf32>
    %64 = vector.extract_strided_slice %44 {offsets = [1, 0, 0], sizes = [1, 16, 128], strides = [1, 1, 1]} : vector<3x16x128xf32> to vector<1x16x128xf32>
    %65 = vector.shape_cast %64 : vector<1x16x128xf32> to vector<16x128xf32>
    %66 = arith.subf %65, %12 : vector<16x128xf32>
    %67 = arith.mulf %66, %66 : vector<16x128xf32>
    %68 = arith.addf %49, %67 : vector<16x128xf32>
    %69 = vector.extract_strided_slice %44 {offsets = [1, 0, 0], sizes = [1, 16, 128], strides = [1, 1, 1]} : vector<3x16x128xf32> to vector<1x16x128xf32>
    %70 = vector.shape_cast %69 : vector<1x16x128xf32> to vector<16x128xf32>
    %c1_i32_16 = arith.constant 1 : i32
    %71 = tpu.dynamic_rotate %70 by %c1_i32_16 dim 1 : vector<16x128xf32>, i32 -> vector<16x128xf32>
    %72 = arith.select %5, %6, %71 : vector<16x128xi1>, vector<16x128xf32>
    %c1_i32_17 = arith.constant 1 : i32
    %73 = tpu.dynamic_rotate %70 by %c1_i32_17 dim 0 : vector<16x128xf32>, i32 -> vector<16x128xf32>
    %74 = arith.select %2, %6, %73 : vector<16x128xi1>, vector<16x128xf32>
    %75 = arith.subf %72, %70 : vector<16x128xf32>
    %76 = math.absf %75 : vector<16x128xf32>
    %77 = arith.subf %74, %70 : vector<16x128xf32>
    %78 = math.absf %77 : vector<16x128xf32>
    %79 = arith.addf %76, %78 : vector<16x128xf32>
    %80 = arith.subf %79, %32 : vector<16x128xf32>
    %81 = math.absf %80 : vector<16x128xf32>
    %82 = arith.addf %63, %81 : vector<16x128xf32>
    %83 = vector.extract_strided_slice %44 {offsets = [2, 0, 0], sizes = [1, 16, 128], strides = [1, 1, 1]} : vector<3x16x128xf32> to vector<1x16x128xf32>
    %84 = vector.shape_cast %83 : vector<1x16x128xf32> to vector<16x128xf32>
    %85 = arith.subf %84, %14 : vector<16x128xf32>
    %86 = arith.mulf %85, %85 : vector<16x128xf32>
    %87 = arith.addf %68, %86 : vector<16x128xf32>
    %88 = vector.extract_strided_slice %44 {offsets = [2, 0, 0], sizes = [1, 16, 128], strides = [1, 1, 1]} : vector<3x16x128xf32> to vector<1x16x128xf32>
    %89 = vector.shape_cast %88 : vector<1x16x128xf32> to vector<16x128xf32>
    %c1_i32_18 = arith.constant 1 : i32
    %90 = tpu.dynamic_rotate %89 by %c1_i32_18 dim 1 : vector<16x128xf32>, i32 -> vector<16x128xf32>
    %91 = arith.select %5, %6, %90 : vector<16x128xi1>, vector<16x128xf32>
    %c1_i32_19 = arith.constant 1 : i32
    %92 = tpu.dynamic_rotate %89 by %c1_i32_19 dim 0 : vector<16x128xf32>, i32 -> vector<16x128xf32>
    %93 = arith.select %2, %6, %92 : vector<16x128xi1>, vector<16x128xf32>
    %94 = arith.subf %91, %89 : vector<16x128xf32>
    %95 = math.absf %94 : vector<16x128xf32>
    %96 = arith.subf %93, %89 : vector<16x128xf32>
    %97 = math.absf %96 : vector<16x128xf32>
    %98 = arith.addf %95, %97 : vector<16x128xf32>
    %99 = arith.subf %98, %41 : vector<16x128xf32>
    %100 = math.absf %99 : vector<16x128xf32>
    %101 = arith.addf %82, %100 : vector<16x128xf32>
    %c0_i32_20 = arith.constant 0 : i32
    %c0_21 = arith.constant 0 : index
    %102 = arith.index_cast %c0_i32_20 : i32 to index
    %c0_22 = arith.constant 0 : index
    %c0_23 = arith.constant 0 : index
    %c0_24 = arith.constant 0 : index
    %103 = vector.load %arg1[%c0_21, %102, %c0_22, %c0_23, %c0_24] : memref<1x4x3x16x128xf32, #tpu.memory_space<vmem>>, vector<1x1x3x16x128xf32>
    %104 = vector.shape_cast %103 : vector<1x1x3x16x128xf32> to vector<3x16x128xf32>
    %105 = vector.extract_strided_slice %104 {offsets = [0, 0, 0], sizes = [1, 16, 128], strides = [1, 1, 1]} : vector<3x16x128xf32> to vector<1x16x128xf32>
    %106 = vector.shape_cast %105 : vector<1x16x128xf32> to vector<16x128xf32>
    %107 = arith.subf %106, %10 : vector<16x128xf32>
    %108 = arith.mulf %107, %107 : vector<16x128xf32>
    %109 = arith.addf %42, %108 : vector<16x128xf32>
    %110 = vector.extract_strided_slice %104 {offsets = [0, 0, 0], sizes = [1, 16, 128], strides = [1, 1, 1]} : vector<3x16x128xf32> to vector<1x16x128xf32>
    %111 = vector.shape_cast %110 : vector<1x16x128xf32> to vector<16x128xf32>
    %c1_i32_25 = arith.constant 1 : i32
    %112 = tpu.dynamic_rotate %111 by %c1_i32_25 dim 1 : vector<16x128xf32>, i32 -> vector<16x128xf32>
    %113 = arith.select %5, %6, %112 : vector<16x128xi1>, vector<16x128xf32>
    %c1_i32_26 = arith.constant 1 : i32
    %114 = tpu.dynamic_rotate %111 by %c1_i32_26 dim 0 : vector<16x128xf32>, i32 -> vector<16x128xf32>
    %115 = arith.select %2, %6, %114 : vector<16x128xi1>, vector<16x128xf32>
    %116 = arith.subf %113, %111 : vector<16x128xf32>
    %117 = math.absf %116 : vector<16x128xf32>
    %118 = arith.subf %115, %111 : vector<16x128xf32>
    %119 = math.absf %118 : vector<16x128xf32>
    %120 = arith.addf %117, %119 : vector<16x128xf32>
    %121 = arith.subf %120, %23 : vector<16x128xf32>
    %122 = math.absf %121 : vector<16x128xf32>
    %123 = arith.addf %42, %122 : vector<16x128xf32>
    %124 = vector.extract_strided_slice %104 {offsets = [1, 0, 0], sizes = [1, 16, 128], strides = [1, 1, 1]} : vector<3x16x128xf32> to vector<1x16x128xf32>
    %125 = vector.shape_cast %124 : vector<1x16x128xf32> to vector<16x128xf32>
    %126 = arith.subf %125, %12 : vector<16x128xf32>
    %127 = arith.mulf %126, %126 : vector<16x128xf32>
    %128 = arith.addf %109, %127 : vector<16x128xf32>
    %129 = vector.extract_strided_slice %104 {offsets = [1, 0, 0], sizes = [1, 16, 128], strides = [1, 1, 1]} : vector<3x16x128xf32> to vector<1x16x128xf32>
    %130 = vector.shape_cast %129 : vector<1x16x128xf32> to vector<16x128xf32>
    %c1_i32_27 = arith.constant 1 : i32
    %131 = tpu.dynamic_rotate %130 by %c1_i32_27 dim 1 : vector<16x128xf32>, i32 -> vector<16x128xf32>
    %132 = arith.select %5, %6, %131 : vector<16x128xi1>, vector<16x128xf32>
    %c1_i32_28 = arith.constant 1 : i32
    %133 = tpu.dynamic_rotate %130 by %c1_i32_28 dim 0 : vector<16x128xf32>, i32 -> vector<16x128xf32>
    %134 = arith.select %2, %6, %133 : vector<16x128xi1>, vector<16x128xf32>
    %135 = arith.subf %132, %130 : vector<16x128xf32>
    %136 = math.absf %135 : vector<16x128xf32>
    %137 = arith.subf %134, %130 : vector<16x128xf32>
    %138 = math.absf %137 : vector<16x128xf32>
    %139 = arith.addf %136, %138 : vector<16x128xf32>
    %140 = arith.subf %139, %32 : vector<16x128xf32>
    %141 = math.absf %140 : vector<16x128xf32>
    %142 = arith.addf %123, %141 : vector<16x128xf32>
    %143 = vector.extract_strided_slice %104 {offsets = [2, 0, 0], sizes = [1, 16, 128], strides = [1, 1, 1]} : vector<3x16x128xf32> to vector<1x16x128xf32>
    %144 = vector.shape_cast %143 : vector<1x16x128xf32> to vector<16x128xf32>
    %145 = arith.subf %144, %14 : vector<16x128xf32>
    %146 = arith.mulf %145, %145 : vector<16x128xf32>
    %147 = arith.addf %128, %146 : vector<16x128xf32>
    %148 = vector.extract_strided_slice %104 {offsets = [2, 0, 0], sizes = [1, 16, 128], strides = [1, 1, 1]} : vector<3x16x128xf32> to vector<1x16x128xf32>
    %149 = vector.shape_cast %148 : vector<1x16x128xf32> to vector<16x128xf32>
    %c1_i32_29 = arith.constant 1 : i32
    %150 = tpu.dynamic_rotate %149 by %c1_i32_29 dim 1 : vector<16x128xf32>, i32 -> vector<16x128xf32>
    %151 = arith.select %5, %6, %150 : vector<16x128xi1>, vector<16x128xf32>
    %c1_i32_30 = arith.constant 1 : i32
    %152 = tpu.dynamic_rotate %149 by %c1_i32_30 dim 0 : vector<16x128xf32>, i32 -> vector<16x128xf32>
    %153 = arith.select %2, %6, %152 : vector<16x128xi1>, vector<16x128xf32>
    %154 = arith.subf %151, %149 : vector<16x128xf32>
    %155 = math.absf %154 : vector<16x128xf32>
    %156 = arith.subf %153, %149 : vector<16x128xf32>
    %157 = math.absf %156 : vector<16x128xf32>
    %158 = arith.addf %155, %157 : vector<16x128xf32>
    %159 = arith.subf %158, %41 : vector<16x128xf32>
    %160 = math.absf %159 : vector<16x128xf32>
    %161 = arith.addf %142, %160 : vector<16x128xf32>
    %c1_i32_31 = arith.constant 1 : i32
    %c0_32 = arith.constant 0 : index
    %162 = arith.index_cast %c1_i32_31 : i32 to index
    %c0_33 = arith.constant 0 : index
    %c0_34 = arith.constant 0 : index
    %c0_35 = arith.constant 0 : index
    %163 = vector.load %arg1[%c0_32, %162, %c0_33, %c0_34, %c0_35] : memref<1x4x3x16x128xf32, #tpu.memory_space<vmem>>, vector<1x1x3x16x128xf32>
    %164 = vector.shape_cast %163 : vector<1x1x3x16x128xf32> to vector<3x16x128xf32>
    %165 = vector.extract_strided_slice %164 {offsets = [0, 0, 0], sizes = [1, 16, 128], strides = [1, 1, 1]} : vector<3x16x128xf32> to vector<1x16x128xf32>
    %166 = vector.shape_cast %165 : vector<1x16x128xf32> to vector<16x128xf32>
    %167 = arith.subf %166, %10 : vector<16x128xf32>
    %168 = arith.mulf %167, %167 : vector<16x128xf32>
    %169 = arith.addf %147, %168 : vector<16x128xf32>
    %170 = vector.extract_strided_slice %164 {offsets = [0, 0, 0], sizes = [1, 16, 128], strides = [1, 1, 1]} : vector<3x16x128xf32> to vector<1x16x128xf32>
    %171 = vector.shape_cast %170 : vector<1x16x128xf32> to vector<16x128xf32>
    %c1_i32_36 = arith.constant 1 : i32
    %172 = tpu.dynamic_rotate %171 by %c1_i32_36 dim 1 : vector<16x128xf32>, i32 -> vector<16x128xf32>
    %173 = arith.select %5, %6, %172 : vector<16x128xi1>, vector<16x128xf32>
    %c1_i32_37 = arith.constant 1 : i32
    %174 = tpu.dynamic_rotate %171 by %c1_i32_37 dim 0 : vector<16x128xf32>, i32 -> vector<16x128xf32>
    %175 = arith.select %2, %6, %174 : vector<16x128xi1>, vector<16x128xf32>
    %176 = arith.subf %173, %171 : vector<16x128xf32>
    %177 = math.absf %176 : vector<16x128xf32>
    %178 = arith.subf %175, %171 : vector<16x128xf32>
    %179 = math.absf %178 : vector<16x128xf32>
    %180 = arith.addf %177, %179 : vector<16x128xf32>
    %181 = arith.subf %180, %23 : vector<16x128xf32>
    %182 = math.absf %181 : vector<16x128xf32>
    %183 = arith.addf %161, %182 : vector<16x128xf32>
    %184 = vector.extract_strided_slice %164 {offsets = [1, 0, 0], sizes = [1, 16, 128], strides = [1, 1, 1]} : vector<3x16x128xf32> to vector<1x16x128xf32>
    %185 = vector.shape_cast %184 : vector<1x16x128xf32> to vector<16x128xf32>
    %186 = arith.subf %185, %12 : vector<16x128xf32>
    %187 = arith.mulf %186, %186 : vector<16x128xf32>
    %188 = arith.addf %169, %187 : vector<16x128xf32>
    %189 = vector.extract_strided_slice %164 {offsets = [1, 0, 0], sizes = [1, 16, 128], strides = [1, 1, 1]} : vector<3x16x128xf32> to vector<1x16x128xf32>
    %190 = vector.shape_cast %189 : vector<1x16x128xf32> to vector<16x128xf32>
    %c1_i32_38 = arith.constant 1 : i32
    %191 = tpu.dynamic_rotate %190 by %c1_i32_38 dim 1 : vector<16x128xf32>, i32 -> vector<16x128xf32>
    %192 = arith.select %5, %6, %191 : vector<16x128xi1>, vector<16x128xf32>
    %c1_i32_39 = arith.constant 1 : i32
    %193 = tpu.dynamic_rotate %190 by %c1_i32_39 dim 0 : vector<16x128xf32>, i32 -> vector<16x128xf32>
    %194 = arith.select %2, %6, %193 : vector<16x128xi1>, vector<16x128xf32>
    %195 = arith.subf %192, %190 : vector<16x128xf32>
    %196 = math.absf %195 : vector<16x128xf32>
    %197 = arith.subf %194, %190 : vector<16x128xf32>
    %198 = math.absf %197 : vector<16x128xf32>
    %199 = arith.addf %196, %198 : vector<16x128xf32>
    %200 = arith.subf %199, %32 : vector<16x128xf32>
    %201 = math.absf %200 : vector<16x128xf32>
    %202 = arith.addf %183, %201 : vector<16x128xf32>
    %203 = vector.extract_strided_slice %164 {offsets = [2, 0, 0], sizes = [1, 16, 128], strides = [1, 1, 1]} : vector<3x16x128xf32> to vector<1x16x128xf32>
    %204 = vector.shape_cast %203 : vector<1x16x128xf32> to vector<16x128xf32>
    %205 = arith.subf %204, %14 : vector<16x128xf32>
    %206 = arith.mulf %205, %205 : vector<16x128xf32>
    %207 = arith.addf %188, %206 : vector<16x128xf32>
    %208 = vector.extract_strided_slice %164 {offsets = [2, 0, 0], sizes = [1, 16, 128], strides = [1, 1, 1]} : vector<3x16x128xf32> to vector<1x16x128xf32>
    %209 = vector.shape_cast %208 : vector<1x16x128xf32> to vector<16x128xf32>
    %c1_i32_40 = arith.constant 1 : i32
    %210 = tpu.dynamic_rotate %209 by %c1_i32_40 dim 1 : vector<16x128xf32>, i32 -> vector<16x128xf32>
    %211 = arith.select %5, %6, %210 : vector<16x128xi1>, vector<16x128xf32>
    %c1_i32_41 = arith.constant 1 : i32
    %212 = tpu.dynamic_rotate %209 by %c1_i32_41 dim 0 : vector<16x128xf32>, i32 -> vector<16x128xf32>
    %213 = arith.select %2, %6, %212 : vector<16x128xi1>, vector<16x128xf32>
    %214 = arith.subf %211, %209 : vector<16x128xf32>
    %215 = math.absf %214 : vector<16x128xf32>
    %216 = arith.subf %213, %209 : vector<16x128xf32>
    %217 = math.absf %216 : vector<16x128xf32>
    %218 = arith.addf %215, %217 : vector<16x128xf32>
    %219 = arith.subf %218, %41 : vector<16x128xf32>
    %220 = math.absf %219 : vector<16x128xf32>
    %221 = arith.addf %202, %220 : vector<16x128xf32>
    %c2_i32 = arith.constant 2 : i32
    %c0_42 = arith.constant 0 : index
    %222 = arith.index_cast %c2_i32 : i32 to index
    %c0_43 = arith.constant 0 : index
    %c0_44 = arith.constant 0 : index
    %c0_45 = arith.constant 0 : index
    %223 = vector.load %arg1[%c0_42, %222, %c0_43, %c0_44, %c0_45] : memref<1x4x3x16x128xf32, #tpu.memory_space<vmem>>, vector<1x1x3x16x128xf32>
    %224 = vector.shape_cast %223 : vector<1x1x3x16x128xf32> to vector<3x16x128xf32>
    %225 = vector.extract_strided_slice %224 {offsets = [0, 0, 0], sizes = [1, 16, 128], strides = [1, 1, 1]} : vector<3x16x128xf32> to vector<1x16x128xf32>
    %226 = vector.shape_cast %225 : vector<1x16x128xf32> to vector<16x128xf32>
    %227 = arith.subf %226, %10 : vector<16x128xf32>
    %228 = arith.mulf %227, %227 : vector<16x128xf32>
    %229 = arith.addf %207, %228 : vector<16x128xf32>
    %230 = vector.extract_strided_slice %224 {offsets = [0, 0, 0], sizes = [1, 16, 128], strides = [1, 1, 1]} : vector<3x16x128xf32> to vector<1x16x128xf32>
    %231 = vector.shape_cast %230 : vector<1x16x128xf32> to vector<16x128xf32>
    %c1_i32_46 = arith.constant 1 : i32
    %232 = tpu.dynamic_rotate %231 by %c1_i32_46 dim 1 : vector<16x128xf32>, i32 -> vector<16x128xf32>
    %233 = arith.select %5, %6, %232 : vector<16x128xi1>, vector<16x128xf32>
    %c1_i32_47 = arith.constant 1 : i32
    %234 = tpu.dynamic_rotate %231 by %c1_i32_47 dim 0 : vector<16x128xf32>, i32 -> vector<16x128xf32>
    %235 = arith.select %2, %6, %234 : vector<16x128xi1>, vector<16x128xf32>
    %236 = arith.subf %233, %231 : vector<16x128xf32>
    %237 = math.absf %236 : vector<16x128xf32>
    %238 = arith.subf %235, %231 : vector<16x128xf32>
    %239 = math.absf %238 : vector<16x128xf32>
    %240 = arith.addf %237, %239 : vector<16x128xf32>
    %241 = arith.subf %240, %23 : vector<16x128xf32>
    %242 = math.absf %241 : vector<16x128xf32>
    %243 = arith.addf %221, %242 : vector<16x128xf32>
    %244 = vector.extract_strided_slice %224 {offsets = [1, 0, 0], sizes = [1, 16, 128], strides = [1, 1, 1]} : vector<3x16x128xf32> to vector<1x16x128xf32>
    %245 = vector.shape_cast %244 : vector<1x16x128xf32> to vector<16x128xf32>
    %246 = arith.subf %245, %12 : vector<16x128xf32>
    %247 = arith.mulf %246, %246 : vector<16x128xf32>
    %248 = arith.addf %229, %247 : vector<16x128xf32>
    %249 = vector.extract_strided_slice %224 {offsets = [1, 0, 0], sizes = [1, 16, 128], strides = [1, 1, 1]} : vector<3x16x128xf32> to vector<1x16x128xf32>
    %250 = vector.shape_cast %249 : vector<1x16x128xf32> to vector<16x128xf32>
    %c1_i32_48 = arith.constant 1 : i32
    %251 = tpu.dynamic_rotate %250 by %c1_i32_48 dim 1 : vector<16x128xf32>, i32 -> vector<16x128xf32>
    %252 = arith.select %5, %6, %251 : vector<16x128xi1>, vector<16x128xf32>
    %c1_i32_49 = arith.constant 1 : i32
    %253 = tpu.dynamic_rotate %250 by %c1_i32_49 dim 0 : vector<16x128xf32>, i32 -> vector<16x128xf32>
    %254 = arith.select %2, %6, %253 : vector<16x128xi1>, vector<16x128xf32>
    %255 = arith.subf %252, %250 : vector<16x128xf32>
    %256 = math.absf %255 : vector<16x128xf32>
    %257 = arith.subf %254, %250 : vector<16x128xf32>
    %258 = math.absf %257 : vector<16x128xf32>
    %259 = arith.addf %256, %258 : vector<16x128xf32>
    %260 = arith.subf %259, %32 : vector<16x128xf32>
    %261 = math.absf %260 : vector<16x128xf32>
    %262 = arith.addf %243, %261 : vector<16x128xf32>
    %263 = vector.extract_strided_slice %224 {offsets = [2, 0, 0], sizes = [1, 16, 128], strides = [1, 1, 1]} : vector<3x16x128xf32> to vector<1x16x128xf32>
    %264 = vector.shape_cast %263 : vector<1x16x128xf32> to vector<16x128xf32>
    %265 = arith.subf %264, %14 : vector<16x128xf32>
    %266 = arith.mulf %265, %265 : vector<16x128xf32>
    %267 = arith.addf %248, %266 : vector<16x128xf32>
    %268 = vector.extract_strided_slice %224 {offsets = [2, 0, 0], sizes = [1, 16, 128], strides = [1, 1, 1]} : vector<3x16x128xf32> to vector<1x16x128xf32>
    %269 = vector.shape_cast %268 : vector<1x16x128xf32> to vector<16x128xf32>
    %c1_i32_50 = arith.constant 1 : i32
    %270 = tpu.dynamic_rotate %269 by %c1_i32_50 dim 1 : vector<16x128xf32>, i32 -> vector<16x128xf32>
    %271 = arith.select %5, %6, %270 : vector<16x128xi1>, vector<16x128xf32>
    %c1_i32_51 = arith.constant 1 : i32
    %272 = tpu.dynamic_rotate %269 by %c1_i32_51 dim 0 : vector<16x128xf32>, i32 -> vector<16x128xf32>
    %273 = arith.select %2, %6, %272 : vector<16x128xi1>, vector<16x128xf32>
    %274 = arith.subf %271, %269 : vector<16x128xf32>
    %275 = math.absf %274 : vector<16x128xf32>
    %276 = arith.subf %273, %269 : vector<16x128xf32>
    %277 = math.absf %276 : vector<16x128xf32>
    %278 = arith.addf %275, %277 : vector<16x128xf32>
    %279 = arith.subf %278, %41 : vector<16x128xf32>
    %280 = math.absf %279 : vector<16x128xf32>
    %281 = arith.addf %262, %280 : vector<16x128xf32>
    %c3_i32 = arith.constant 3 : i32
    %c0_52 = arith.constant 0 : index
    %282 = arith.index_cast %c3_i32 : i32 to index
    %c0_53 = arith.constant 0 : index
    %c0_54 = arith.constant 0 : index
    %c0_55 = arith.constant 0 : index
    %283 = vector.load %arg1[%c0_52, %282, %c0_53, %c0_54, %c0_55] : memref<1x4x3x16x128xf32, #tpu.memory_space<vmem>>, vector<1x1x3x16x128xf32>
    %284 = vector.shape_cast %283 : vector<1x1x3x16x128xf32> to vector<3x16x128xf32>
    %285 = vector.extract_strided_slice %284 {offsets = [0, 0, 0], sizes = [1, 16, 128], strides = [1, 1, 1]} : vector<3x16x128xf32> to vector<1x16x128xf32>
    %286 = vector.shape_cast %285 : vector<1x16x128xf32> to vector<16x128xf32>
    %287 = arith.subf %286, %10 : vector<16x128xf32>
    %288 = arith.mulf %287, %287 : vector<16x128xf32>
    %289 = arith.addf %267, %288 : vector<16x128xf32>
    %290 = vector.extract_strided_slice %284 {offsets = [0, 0, 0], sizes = [1, 16, 128], strides = [1, 1, 1]} : vector<3x16x128xf32> to vector<1x16x128xf32>
    %291 = vector.shape_cast %290 : vector<1x16x128xf32> to vector<16x128xf32>
    %c1_i32_56 = arith.constant 1 : i32
    %292 = tpu.dynamic_rotate %291 by %c1_i32_56 dim 1 : vector<16x128xf32>, i32 -> vector<16x128xf32>
    %293 = arith.select %5, %6, %292 : vector<16x128xi1>, vector<16x128xf32>
    %c1_i32_57 = arith.constant 1 : i32
    %294 = tpu.dynamic_rotate %291 by %c1_i32_57 dim 0 : vector<16x128xf32>, i32 -> vector<16x128xf32>
    %295 = arith.select %2, %6, %294 : vector<16x128xi1>, vector<16x128xf32>
    %296 = arith.subf %293, %291 : vector<16x128xf32>
    %297 = math.absf %296 : vector<16x128xf32>
    %298 = arith.subf %295, %291 : vector<16x128xf32>
    %299 = math.absf %298 : vector<16x128xf32>
    %300 = arith.addf %297, %299 : vector<16x128xf32>
    %301 = arith.subf %300, %23 : vector<16x128xf32>
    %302 = math.absf %301 : vector<16x128xf32>
    %303 = arith.addf %281, %302 : vector<16x128xf32>
    %304 = vector.extract_strided_slice %284 {offsets = [1, 0, 0], sizes = [1, 16, 128], strides = [1, 1, 1]} : vector<3x16x128xf32> to vector<1x16x128xf32>
    %305 = vector.shape_cast %304 : vector<1x16x128xf32> to vector<16x128xf32>
    %306 = arith.subf %305, %12 : vector<16x128xf32>
    %307 = arith.mulf %306, %306 : vector<16x128xf32>
    %308 = arith.addf %289, %307 : vector<16x128xf32>
    %309 = vector.extract_strided_slice %284 {offsets = [1, 0, 0], sizes = [1, 16, 128], strides = [1, 1, 1]} : vector<3x16x128xf32> to vector<1x16x128xf32>
    %310 = vector.shape_cast %309 : vector<1x16x128xf32> to vector<16x128xf32>
    %c1_i32_58 = arith.constant 1 : i32
    %311 = tpu.dynamic_rotate %310 by %c1_i32_58 dim 1 : vector<16x128xf32>, i32 -> vector<16x128xf32>
    %312 = arith.select %5, %6, %311 : vector<16x128xi1>, vector<16x128xf32>
    %c1_i32_59 = arith.constant 1 : i32
    %313 = tpu.dynamic_rotate %310 by %c1_i32_59 dim 0 : vector<16x128xf32>, i32 -> vector<16x128xf32>
    %314 = arith.select %2, %6, %313 : vector<16x128xi1>, vector<16x128xf32>
    %315 = arith.subf %312, %310 : vector<16x128xf32>
    %316 = math.absf %315 : vector<16x128xf32>
    %317 = arith.subf %314, %310 : vector<16x128xf32>
    %318 = math.absf %317 : vector<16x128xf32>
    %319 = arith.addf %316, %318 : vector<16x128xf32>
    %320 = arith.subf %319, %32 : vector<16x128xf32>
    %321 = math.absf %320 : vector<16x128xf32>
    %322 = arith.addf %303, %321 : vector<16x128xf32>
    %323 = vector.extract_strided_slice %284 {offsets = [2, 0, 0], sizes = [1, 16, 128], strides = [1, 1, 1]} : vector<3x16x128xf32> to vector<1x16x128xf32>
    %324 = vector.shape_cast %323 : vector<1x16x128xf32> to vector<16x128xf32>
    %325 = arith.subf %324, %14 : vector<16x128xf32>
    %326 = arith.mulf %325, %325 : vector<16x128xf32>
    %327 = arith.addf %308, %326 : vector<16x128xf32>
    %328 = vector.extract_strided_slice %284 {offsets = [2, 0, 0], sizes = [1, 16, 128], strides = [1, 1, 1]} : vector<3x16x128xf32> to vector<1x16x128xf32>
    %329 = vector.shape_cast %328 : vector<1x16x128xf32> to vector<16x128xf32>
    %c1_i32_60 = arith.constant 1 : i32
    %330 = tpu.dynamic_rotate %329 by %c1_i32_60 dim 1 : vector<16x128xf32>, i32 -> vector<16x128xf32>
    %331 = arith.select %5, %6, %330 : vector<16x128xi1>, vector<16x128xf32>
    %c1_i32_61 = arith.constant 1 : i32
    %332 = tpu.dynamic_rotate %329 by %c1_i32_61 dim 0 : vector<16x128xf32>, i32 -> vector<16x128xf32>
    %333 = arith.select %2, %6, %332 : vector<16x128xi1>, vector<16x128xf32>
    %334 = arith.subf %331, %329 : vector<16x128xf32>
    %335 = math.absf %334 : vector<16x128xf32>
    %336 = arith.subf %333, %329 : vector<16x128xf32>
    %337 = math.absf %336 : vector<16x128xf32>
    %338 = arith.addf %335, %337 : vector<16x128xf32>
    %339 = arith.subf %338, %41 : vector<16x128xf32>
    %340 = math.absf %339 : vector<16x128xf32>
    %341 = arith.addf %322, %340 : vector<16x128xf32>
    %c4_i32 = arith.constant 4 : i32
    %cst_62 = arith.constant 0.000000e+00 : f32
    %342 = vector.broadcast %cst_62 : f32 to vector<1x1xf32>
    %343 = vector.shape_cast %87 : vector<16x128xf32> to vector<1x16x128xf32>
    %cst_63 = arith.constant dense<0.000000e+00> : vector<1xf32>
    %344 = vector.multi_reduction <add>, %343, %cst_63 [1, 2] : vector<1x16x128xf32> to vector<1xf32>
    %345 = vector.shape_cast %344 : vector<1xf32> to vector<1x1x1xf32>
    %346 = vector.extract %345[0, 0, 0] : f32 from vector<1x1x1xf32>
    %347 = vector.broadcast %346 : f32 to vector<1x1xf32>
    %348 = arith.addf %342, %347 : vector<1x1xf32>
    %c0_64 = arith.constant 0 : index
    %c0_65 = arith.constant 0 : index
    %c0_66 = arith.constant 0 : index
    %349 = vector.load %arg4[%c0_64, %c0_65, %c0_66] : memref<1x1x1xf32, #tpu.memory_space<vmem>>, vector<1x1x1xf32>
    %350 = vector.shape_cast %349 : vector<1x1x1xf32> to vector<1x1xf32>
    %351 = vector.shape_cast %348 : vector<1x1xf32> to vector<1x1x1xf32>
    tpu.vector_store %arg4[%c0_64, %c0_65, %c0_66], %351 {strides = array<i32>} : memref<1x1x1xf32, #tpu.memory_space<vmem>>, vector<1x1x1xf32>,
    %352 = vector.shape_cast %101 : vector<16x128xf32> to vector<1x16x128xf32>
    %cst_67 = arith.constant dense<0.000000e+00> : vector<1xf32>
    %353 = vector.multi_reduction <add>, %352, %cst_67 [1, 2] : vector<1x16x128xf32> to vector<1xf32>
    %354 = vector.shape_cast %353 : vector<1xf32> to vector<1x1x1xf32>
    %355 = vector.extract %354[0, 0, 0] : f32 from vector<1x1x1xf32>
    %356 = vector.broadcast %355 : f32 to vector<1x1xf32>
    %357 = arith.addf %342, %356 : vector<1x1xf32>
    %c0_68 = arith.constant 0 : index
    %c0_69 = arith.constant 0 : index
    %c0_70 = arith.constant 0 : index
    %358 = vector.load %arg5[%c0_68, %c0_69, %c0_70] : memref<1x1x1xf32, #tpu.memory_space<vmem>>, vector<1x1x1xf32>
    %359 = vector.shape_cast %358 : vector<1x1x1xf32> to vector<1x1xf32>
    %360 = vector.shape_cast %357 : vector<1x1xf32> to vector<1x1x1xf32>
    tpu.vector_store %arg5[%c0_68, %c0_69, %c0_70], %360 {strides = array<i32>} : memref<1x1x1xf32, #tpu.memory_space<vmem>>, vector<1x1x1xf32>,
    %361 = vector.shape_cast %327 : vector<16x128xf32> to vector<1x16x128xf32>
    %cst_71 = arith.constant dense<0.000000e+00> : vector<1xf32>
    %362 = vector.multi_reduction <add>, %361, %cst_71 [1, 2] : vector<1x16x128xf32> to vector<1xf32>
    %363 = vector.shape_cast %362 : vector<1xf32> to vector<1x1x1xf32>
    %364 = vector.extract %363[0, 0, 0] : f32 from vector<1x1x1xf32>
    %365 = vector.broadcast %364 : f32 to vector<1x1xf32>
    %366 = arith.addf %342, %365 : vector<1x1xf32>
    %c0_72 = arith.constant 0 : index
    %c0_73 = arith.constant 0 : index
    %c0_74 = arith.constant 0 : index
    %367 = vector.load %arg6[%c0_72, %c0_73, %c0_74] : memref<1x1x1xf32, #tpu.memory_space<vmem>>, vector<1x1x1xf32>
    %368 = vector.shape_cast %367 : vector<1x1x1xf32> to vector<1x1xf32>
    %369 = vector.shape_cast %366 : vector<1x1xf32> to vector<1x1x1xf32>
    tpu.vector_store %arg6[%c0_72, %c0_73, %c0_74], %369 {strides = array<i32>} : memref<1x1x1xf32, #tpu.memory_space<vmem>>, vector<1x1x1xf32>,
    %370 = vector.shape_cast %341 : vector<16x128xf32> to vector<1x16x128xf32>
    %cst_75 = arith.constant dense<0.000000e+00> : vector<1xf32>
    %371 = vector.multi_reduction <add>, %370, %cst_75 [1, 2] : vector<1x16x128xf32> to vector<1xf32>
    %372 = vector.shape_cast %371 : vector<1xf32> to vector<1x1x1xf32>
    %373 = vector.extract %372[0, 0, 0] : f32 from vector<1x1x1xf32>
    %374 = vector.broadcast %373 : f32 to vector<1x1xf32>
    %375 = arith.addf %342, %374 : vector<1x1xf32>
    %c0_76 = arith.constant 0 : index
    %c0_77 = arith.constant 0 : index
    %c0_78 = arith.constant 0 : index
    %376 = vector.load %arg7[%c0_76, %c0_77, %c0_78] : memref<1x1x1xf32, #tpu.memory_space<vmem>>, vector<1x1x1xf32>
    %377 = vector.shape_cast %376 : vector<1x1x1xf32> to vector<1x1xf32>
    %378 = vector.shape_cast %375 : vector<1x1xf32> to vector<1x1x1xf32>
    tpu.vector_store %arg7[%c0_76, %c0_77, %c0_78], %378 {strides = array<i32>} : memref<1x1x1xf32, #tpu.memory_space<vmem>>, vector<1x1x1xf32>,
    return
  }
  func.func @transform_0(%arg0: i32) -> (i32, i32, i32, i32, i32) {
    %c0_i32 = arith.constant 0 : i32
    %c0_i32_0 = arith.constant 0 : i32
    %c0_i32_1 = arith.constant 0 : i32
    %c0_i32_2 = arith.constant 0 : i32
    %c0_i32_3 = arith.constant 0 : i32
    return %arg0, %c0_i32, %c0_i32_0, %c0_i32_1, %c0_i32_2 : i32, i32, i32, i32, i32
  }
  func.func @transform_1(%arg0: i32) -> (i32, i32, i32, i32) {
    %c0_i32 = arith.constant 0 : i32
    %c0_i32_0 = arith.constant 0 : i32
    %c0_i32_1 = arith.constant 0 : i32
    %c0_i32_2 = arith.constant 0 : i32
    return %arg0, %c0_i32, %c0_i32_0, %c0_i32_1 : i32, i32, i32, i32
  }
  func.func @transform_2(%arg0: i32) -> (i32, i32, i32, i32) {
    %c0_i32 = arith.constant 0 : i32
    %c0_i32_0 = arith.constant 0 : i32
    %c0_i32_1 = arith.constant 0 : i32
    %c0_i32_2 = arith.constant 0 : i32
    return %arg0, %c0_i32, %c0_i32_0, %c0_i32_1 : i32, i32, i32, i32
  }
  func.func @transform_3(%arg0: i32) -> (i32, i32, i32) {
    %c0_i32 = arith.constant 0 : i32
    %c0_i32_0 = arith.constant 0 : i32
    %c0_i32_1 = arith.constant 0 : i32
    return %arg0, %c0_i32, %c0_i32_0 : i32, i32, i32
  }
  func.func @transform_4(%arg0: i32) -> (i32, i32, i32) {
    %c0_i32 = arith.constant 0 : i32
    %c0_i32_0 = arith.constant 0 : i32
    %c0_i32_1 = arith.constant 0 : i32
    return %arg0, %c0_i32, %c0_i32_0 : i32, i32, i32
  }
  func.func @transform_5(%arg0: i32) -> (i32, i32, i32) {
    %c0_i32 = arith.constant 0 : i32
    %c0_i32_0 = arith.constant 0 : i32
    %c0_i32_1 = arith.constant 0 : i32
    return %arg0, %c0_i32, %c0_i32_0 : i32, i32, i32
  }
  func.func @transform_6(%arg0: i32) -> (i32, i32, i32) {
    %c0_i32 = arith.constant 0 : i32
    %c0_i32_0 = arith.constant 0 : i32
    %c0_i32_1 = arith.constant 0 : i32
    return %arg0, %c0_i32, %c0_i32_0 : i32, i32, i32
  }
}

</mosaic_0001>

<llo_original>
// kernel: loss_func_forward.1
$region0: #{loss_func_forward.1}
  #allocation0 [shape = 'u32[]', space=smem, size = 0x4, offset = 0x4, fixed_abs, tag = 'smem constant byte address 0x4 - core index']
  #allocation1 [shape = 'u32[72,128]{1,0:T(1,128)}', space=vmem, size = 0x9000, scoped, tag = 'internal scratch']
  %s0 = inlined_call_operand.hbm [shape: f32[2,4,3,16,128], index: 0, kind: input, shape index: {}]
  %s1 = inlined_call_operand.hbm [shape: f32[2,3,16,128], index: 1, kind: input, shape index: {}]
  %s2 = inlined_call_operand.hbm [shape: f32[2,3,16,128], index: 2, kind: input, shape index: {}]
  %s3 = inlined_call_operand.vmem [shape: f32[2,1,1], index: 3, kind: output, shape index: {0}]
  %s4 = inlined_call_operand.vmem [shape: f32[2,1,1], index: 4, kind: output, shape index: {1}]
  %s5 = inlined_call_operand.vmem [shape: f32[2,1,1], index: 5, kind: output, shape index: {2}]
  %s6 = inlined_call_operand.vmem [shape: f32[2,1,1], index: 6, kind: output, shape index: {3}]
  %7 = xla_tuple %s3, %s4, %s5, %s6
  %s8 = sld [smem:[#allocation0]]
  $region81: #{loss_func_forward.1} parent=0
    _
  %s10 = ssub.s32 1, %s8
  %s11 = scalar_select 0, %s10, %s8
  $region1: #{loss_func_forward.1} parent=0
    #allocation2 [shape = 'u8[196608]{0}', space=vmem, size = 0x30000, scoped, tag = 'input window, operand 0']
    #allocation3 [shape = 's32[2]{0}', space=sflag, size = 0x8, scoped, tag = 'scoped memory for loss_func_forward.1']
    #allocation4 [shape = 'u8[49152]{0}', space=vmem, size = 0xc000, scoped, tag = 'input window, operand 1']
    #allocation5 [shape = 's32[2]{0}', space=sflag, size = 0x8, scoped, tag = 'scoped memory for loss_func_forward.1']
    #allocation6 [shape = 'u8[49152]{0}', space=vmem, size = 0xc000, scoped, tag = 'input window, operand 2']
    %12 = vsyncpa [#allocation3], 0
    %s13 = scalar_lea.sflag [#allocation3], 1
    %14 = vsyncpa %s13, 0
    %15 = vsyncpa [#allocation5], 0
    %s16 = scalar_lea.sflag [#allocation5], 1
    %17 = vsyncpa %s16, 0
    loop: start=0, step=1, limit=4
    $region2: #{loss_func_forward.1} parent=1 // loop_pre_header
      _
    $region3: #{loss_func_forward.1} parent=1 // loop_header
      %s19 = sphi 0, %s23
      %p20 = scmp.ge.s32.totalorder %s19, 4
      %s29 = sphi 0, %s31
      %s32 = sphi 0, %s29
      %s33 = sphi 0, %s32
      %s49 = sphi 0, %s33
      %s55 = sphi 0, %s57
      %s58 = sphi 0, %s55
      %s59 = sphi 0, %s58
      %s75 = sphi 0, %s59
      %s81 = sphi 0, %s83
      %s84 = sphi 0, %s81
      %s85 = sphi 0, %s84
      %s101 = sphi 0, %s85
      %s107 = sphi 0, %s109
      %s110 = sphi 0, %s107
      %s111 = sphi 0, %s110
      %s127 = sphi 0, %s111
      %s133 = sphi 0, %s135
      %s136 = sphi 0, %s133
      %s137 = sphi 0, %s136
      %s153 = sphi 0, %s137
      %s159 = sphi 0, %s161
      %s162 = sphi 0, %s159
      %s163 = sphi 0, %s162
      %s179 = sphi 0, %s163
      %s185 = sphi 0, %s187
      %s188 = sphi 0, %s185
      %s189 = sphi 0, %s188
      %s205 = sphi 0, %s189
    $region4: #{loss_func_forward.1} parent=1 // loop_header_branch
      %22 = sbr.rel (%p20) target = $region8
    $region5: #{loss_func_forward.1} parent=1 // loop_body
      %s24 = ssub.s32 %s19, 1
      %s25 = ssub.s32 %s19, 2
      %s26 = sadd.s32 %s19, 1
      %s27 = ssub.s32 %s19, %s26
      %p28 = scmp.eq.s32.totalorder %s27, 0
      %s30 = sadd.s32 %s29, 1
      %s31 = scalar_select %p28, %s29, %s30
      %p34 = pneg %p28
      %p35 = scmp.eq.s32.totalorder %s19, 1
      %p36 = por %p34, %p35
      %p37 = scmp.ne.s32.totalorder %s29, %s32
      %p38 = scmp.eq.s32.totalorder %s19, 0
      %p39 = por %p37, %p38
      %p40 = scmp.ne.s32.totalorder %s29, %s32
      %p41 = scmp.eq.s32.totalorder %s24, 1
      %p42 = por %p40, %p41
      %p43 = scmp.ne.s32.totalorder %s32, %s33
      %p44 = scmp.eq.s32.totalorder %s24, 0
      %p45 = por %p43, %p44
      %p46 = scmp.ne.s32.totalorder %s32, %s33
      %p47 = scmp.eq.s32.totalorder %s25, 1
      %p48 = por %p46, %p47
      %p50 = scmp.ne.s32.totalorder %s33, %s49
      %p51 = scmp.eq.s32.totalorder %s25, 0
      %p52 = por %p50, %p51
      %s53 = ssub.s32 %s19, %s26
      %p54 = scmp.eq.s32.totalorder %s53, 0
      %s56 = sadd.s32 %s55, 1
      %s57 = scalar_select %p54, %s55, %s56
      %p60 = pneg %p54
      %p61 = scmp.eq.s32.totalorder %s19, 1
      %p62 = por %p60, %p61
      %p63 = scmp.ne.s32.totalorder %s55, %s58
      %p64 = scmp.eq.s32.totalorder %s19, 0
      %p65 = por %p63, %p64
      %p66 = scmp.ne.s32.totalorder %s55, %s58
      %p67 = scmp.eq.s32.totalorder %s24, 1
      %p68 = por %p66, %p67
      %p69 = scmp.ne.s32.totalorder %s58, %s59
      %p70 = scmp.eq.s32.totalorder %s24, 0
      %p71 = por %p69, %p70
      %p72 = scmp.ne.s32.totalorder %s58, %s59
      %p73 = scmp.eq.s32.totalorder %s25, 1
      %p74 = por %p72, %p73
      %p76 = scmp.ne.s32.totalorder %s59, %s75
      %p77 = scmp.eq.s32.totalorder %s25, 0
      %p78 = por %p76, %p77
      %s79 = ssub.s32 %s19, %s26
      %p80 = scmp.eq.s32.totalorder %s79, 0
      %s82 = sadd.s32 %s81, 1
      %s83 = scalar_select %p80, %s81, %s82
      %p86 = pneg %p80
      %p87 = scmp.eq.s32.totalorder %s19, 1
      %p88 = por %p86, %p87
      %p89 = scmp.ne.s32.totalorder %s81, %s84
      %p90 = scmp.eq.s32.totalorder %s19, 0
      %p91 = por %p89, %p90
      %p92 = scmp.ne.s32.totalorder %s81, %s84
      %p93 = scmp.eq.s32.totalorder %s24, 1
      %p94 = por %p92, %p93
      %p95 = scmp.ne.s32.totalorder %s84, %s85
      %p96 = scmp.eq.s32.totalorder %s24, 0
      %p97 = por %p95, %p96
      %p98 = scmp.ne.s32.totalorder %s84, %s85
      %p99 = scmp.eq.s32.totalorder %s25, 1
      %p100 = por %p98, %p99
      %p102 = scmp.ne.s32.totalorder %s85, %s101
      %p103 = scmp.eq.s32.totalorder %s25, 0
      %p104 = por %p102, %p103
      %s105 = ssub.s32 %s19, %s26
      %p106 = scmp.eq.s32.totalorder %s105, 0
      %s108 = sadd.s32 %s107, 1
      %s109 = scalar_select %p106, %s107, %s108
      %p112 = pneg %p106
      %p113 = scmp.eq.s32.totalorder %s19, 1
      %p114 = por %p112, %p113
      %p115 = scmp.ne.s32.totalorder %s107, %s110
      %p116 = scmp.eq.s32.totalorder %s19, 0
      %p117 = por %p115, %p116
      %p118 = scmp.ne.s32.totalorder %s107, %s110
      %p119 = scmp.eq.s32.totalorder %s24, 1
      %p120 = por %p118, %p119
      %p121 = scmp.ne.s32.totalorder %s110, %s111
      %p122 = scmp.eq.s32.totalorder %s24, 0
      %p123 = por %p121, %p122
      %p124 = scmp.ne.s32.totalorder %s110, %s111
      %p125 = scmp.eq.s32.totalorder %s25, 1
      %p126 = por %p124, %p125
      %p128 = scmp.ne.s32.totalorder %s111, %s127
      %p129 = scmp.eq.s32.totalorder %s25, 0
      %p130 = por %p128, %p129
      %s131 = ssub.s32 %s19, %s26
      %p132 = scmp.eq.s32.totalorder %s131, 0
      %s134 = sadd.s32 %s133, 1
      %s135 = scalar_select %p132, %s133, %s134
      %p138 = pneg %p132
      %p139 = scmp.eq.s32.totalorder %s19, 1
      %p140 = por %p138, %p139
      %p141 = scmp.ne.s32.totalorder %s133, %s136
      %p142 = scmp.eq.s32.totalorder %s19, 0
      %p143 = por %p141, %p142
      %p144 = scmp.ne.s32.totalorder %s133, %s136
      %p145 = scmp.eq.s32.totalorder %s24, 1
      %p146 = por %p144, %p145
      %p147 = scmp.ne.s32.totalorder %s136, %s137
      %p148 = scmp.eq.s32.totalorder %s24, 0
      %p149 = por %p147, %p148
      %p150 = scmp.ne.s32.totalorder %s136, %s137
      %p151 = scmp.eq.s32.totalorder %s25, 1
      %p152 = por %p150, %p151
      %p154 = scmp.ne.s32.totalorder %s137, %s153
      %p155 = scmp.eq.s32.totalorder %s25, 0
      %p156 = por %p154, %p155
      %s157 = ssub.s32 %s19, %s26
      %p158 = scmp.eq.s32.totalorder %s157, 0
      %s160 = sadd.s32 %s159, 1
      %s161 = scalar_select %p158, %s159, %s160
      %p164 = pneg %p158
      %p165 = scmp.eq.s32.totalorder %s19, 1
      %p166 = por %p164, %p165
      %p167 = scmp.ne.s32.totalorder %s159, %s162
      %p168 = scmp.eq.s32.totalorder %s19, 0
      %p169 = por %p167, %p168
      %p170 = scmp.ne.s32.totalorder %s159, %s162
      %p171 = scmp.eq.s32.totalorder %s24, 1
      %p172 = por %p170, %p171
      %p173 = scmp.ne.s32.totalorder %s162, %s163
      %p174 = scmp.eq.s32.totalorder %s24, 0
      %p175 = por %p173, %p174
      %p176 = scmp.ne.s32.totalorder %s162, %s163
      %p177 = scmp.eq.s32.totalorder %s25, 1
      %p178 = por %p176, %p177
      %p180 = scmp.ne.s32.totalorder %s163, %s179
      %p181 = scmp.eq.s32.totalorder %s25, 0
      %p182 = por %p180, %p181
      %s183 = ssub.s32 %s19, %s26
      %p184 = scmp.eq.s32.totalorder %s183, 0
      %s186 = sadd.s32 %s185, 1
      %s187 = scalar_select %p184, %s185, %s186
      %p190 = pneg %p184
      %p191 = scmp.eq.s32.totalorder %s19, 1
      %p192 = por %p190, %p191
      %p193 = scmp.ne.s32.totalorder %s185, %s188
      %p194 = scmp.eq.s32.totalorder %s19, 0
      %p195 = por %p193, %p194
      %p196 = scmp.ne.s32.totalorder %s185, %s188
      %p197 = scmp.eq.s32.totalorder %s24, 1
      %p198 = por %p196, %p197
      %p199 = scmp.ne.s32.totalorder %s188, %s189
      %p200 = scmp.eq.s32.totalorder %s24, 0
      %p201 = por %p199, %p200
      %p202 = scmp.ne.s32.totalorder %s188, %s189
      %p203 = scmp.eq.s32.totalorder %s25, 1
      %p204 = por %p202, %p203
      %p206 = scmp.ne.s32.totalorder %s189, %s205
      %p207 = scmp.eq.s32.totalorder %s25, 0
      %p208 = por %p206, %p207
      %p209 = scmp.le.s32.totalorder 1, %s19
      %p210 = scmp.lt.s32.totalorder %s19, 3
      %p211 = pnand %p209, %p210
      %p212 = pneg %p211
      // Predicated region
      $region9: #{loss_func_forward.1} parent=5 // pred_check
        _
      $region10: #{loss_func_forward.1} parent=5 // pred_check_branch
        %214 = sbr.rel (%p211) target = $region12
      $region11: #{loss_func_forward.1} parent=5 // pred_region
        %s215 = ssub.s32 %s19, 1
      $region12: #{loss_func_forward.1} parent=5 // pred_fallthru
        _
      %p216 = scmp.lt.s32.totalorder %s19, 2
      // Predicated region
      $region13: #{loss_func_forward.1} parent=5 // pred_check
        %p217 = pneg %p216
      $region14: #{loss_func_forward.1} parent=5 // pred_check_branch
        %219 = sbr.rel (%p217) target = $region16
      $region15: #{loss_func_forward.1} parent=5 // pred_region
        // Predicated region
        $region17: #{loss_func_forward.1} parent=15 // pred_check
          %p220 = pneg %p39
        $region18: #{loss_func_forward.1} parent=15 // pred_check_branch
          %222 = sbr.rel (%p220) target = $region20
        $region19: #{loss_func_forward.1} parent=15 // pred_region
          %s223 = sand.u32 %s29, 1
          %s224 = scalar_lea.sflag [#allocation3], %s223
          %s225 = sand.u32 %s29, 1
          %s226 = smul.addr %s225, 192
          %s227 = scalar_lea.vmem [#allocation2], %s226
          %229 = vsyncadd %s224, 0
          %s230 = smul.addr %s19, 24
          %s231 = smul.addr %s230, 8
          %s232 = scalar_lea.hbm %s0, %s231
          %s233 = sshll.u32 %s232, 4
          %s234 = int_to_ptr.hbm [resolvable:$true] %s233
          %s235 = sshll.u32 %s227, 4
          %s236 = int_to_ptr.vmem [resolvable:$true] %s235
          %241 = dma.hbm_to_vmem [thread:$0]  %s234, 3072, %s236, %s224, 128, 128, 8
        $region20: #{loss_func_forward.1} parent=15 // pred_fallthru
          _
        // Predicated region
        $region21: #{loss_func_forward.1} parent=15 // pred_check
          %p242 = pneg %p65
        $region22: #{loss_func_forward.1} parent=15 // pred_check_branch
          %244 = sbr.rel (%p242) target = $region24
        $region23: #{loss_func_forward.1} parent=15 // pred_region
          %s245 = sand.u32 %s19, 1
          %s246 = scalar_lea.sflag [#allocation5], %s245
          %s247 = sand.u32 %s55, 1
          %s248 = smul.addr %s247, 48
          %s249 = scalar_lea.vmem [#allocation4], %s248
          %251 = vsyncadd %s246, 0
          %s252 = smul.addr %s19, 6
          %s253 = smul.addr %s252, 8
          %s254 = scalar_lea.hbm %s1, %s253
          %s255 = sshll.u32 %s254, 4
          %s256 = int_to_ptr.hbm [resolvable:$true] %s255
          %s257 = sshll.u32 %s249, 4
          %s258 = int_to_ptr.vmem [resolvable:$true] %s257
          %263 = dma.hbm_to_vmem [thread:$0]  %s256, 768, %s258, %s246, 128, 128, 8
        $region24: #{loss_func_forward.1} parent=15 // pred_fallthru
          _
        // Predicated region
        $region25: #{loss_func_forward.1} parent=15 // pred_check
          %p264 = pneg %p91
        $region26: #{loss_func_forward.1} parent=15 // pred_check_branch
          %266 = sbr.rel (%p264) target = $region28
        $region27: #{loss_func_forward.1} parent=15 // pred_region
          %s267 = sand.u32 %s19, 1
          %s268 = scalar_lea.sflag [#allocation5], %s267
          %s269 = sand.u32 %s81, 1
          %s270 = smul.addr %s269, 48
          %s271 = scalar_lea.vmem [#allocation6], %s270
          %273 = vsyncadd %s268, 0
          %s274 = smul.addr %s19, 6
          %s275 = smul.addr %s274, 8
          %s276 = scalar_lea.hbm %s2, %s275
          %s277 = sshll.u32 %s276, 4
          %s278 = int_to_ptr.hbm [resolvable:$true] %s277
          %s279 = sshll.u32 %s271, 4
          %s280 = int_to_ptr.vmem [resolvable:$true] %s279
          %285 = dma.hbm_to_vmem [thread:$0]  %s278, 768, %s280, %s268, 128, 128, 8
        $region28: #{loss_func_forward.1} parent=15 // pred_fallthru
          _
      $region16: #{loss_func_forward.1} parent=5 // pred_fallthru
        _
      %p286 = scmp.le.s32.totalorder 1, %s19
      %p287 = scmp.lt.s32.totalorder %s19, 3
      %p288 = pnand %p286, %p287
      %p289 = pneg %p288
      // Predicated region
      $region29: #{loss_func_forward.1} parent=5 // pred_check
        _
      $region30: #{loss_func_forward.1} parent=5 // pred_check_branch
        %291 = sbr.rel (%p288) target = $region32
      $region31: #{loss_func_forward.1} parent=5 // pred_region
        %s292 = ssub.s32 %s19, 1
        %s293 = sand.u32 %s32, 1
        %s294 = scalar_lea.sflag [#allocation3], %s293
        %s295 = sand.u32 %s32, 1
        %s296 = smul.addr %s295, 192
        %s297 = scalar_lea.vmem [#allocation2], %s296
        // Predicated region
        $region33: #{loss_func_forward.1} parent=31 // pred_check
          %p298 = pneg %p45
        $region34: #{loss_func_forward.1} parent=31 // pred_check_branch
          %300 = sbr.rel (%p298) target = $region36
        $region35: #{loss_func_forward.1} parent=31 // pred_region
          %302 = dma.done %s294, 3072
        $region36: #{loss_func_forward.1} parent=31 // pred_fallthru
          _
        %s303 = sand.u32 %s24, 1
        %s304 = scalar_lea.sflag [#allocation5], %s303
        %s305 = sand.u32 %s58, 1
        %s306 = smul.addr %s305, 48
        %s307 = scalar_lea.vmem [#allocation4], %s306
        // Predicated region
        $region37: #{loss_func_forward.1} parent=31 // pred_check
          %p308 = pneg %p71
        $region38: #{loss_func_forward.1} parent=31 // pred_check_branch
          %310 = sbr.rel (%p308) target = $region40
        $region39: #{loss_func_forward.1} parent=31 // pred_region
          %312 = dma.done %s304, 768
        $region40: #{loss_func_forward.1} parent=31 // pred_fallthru
          _
        %s313 = sand.u32 %s24, 1
        %s314 = scalar_lea.sflag [#allocation5], %s313
        %s315 = sand.u32 %s84, 1
        %s316 = smul.addr %s315, 48
        %s317 = scalar_lea.vmem [#allocation6], %s316
        // Predicated region
        $region41: #{loss_func_forward.1} parent=31 // pred_check
          %p318 = pneg %p97
        $region42: #{loss_func_forward.1} parent=31 // pred_check_branch
          %320 = sbr.rel (%p318) target = $region44
        $region43: #{loss_func_forward.1} parent=31 // pred_region
          %322 = dma.done %s314, 768
        $region44: #{loss_func_forward.1} parent=31 // pred_fallthru
          _
        %s323 = sand.u32 %s32, 1
        %s324 = scalar_lea.sflag [#allocation3], %s323
        %s325 = sand.u32 %s32, 1
        %s326 = smul.addr %s325, 192
        %s327 = scalar_lea.vmem [#allocation2], %s326
        %p328 = pneg %p45
        %p329 = pneg %p42
        %s330 = sand.u32 %s24, 1
        %s331 = scalar_lea.sflag [#allocation5], %s330
        %s332 = sand.u32 %s58, 1
        %s333 = smul.addr %s332, 48
        %s334 = scalar_lea.vmem [#allocation4], %s333
        %p335 = pneg %p71
        %p336 = pneg %p68
        %s337 = sand.u32 %s24, 1
        %s338 = scalar_lea.sflag [#allocation5], %s337
        %s339 = sand.u32 %s84, 1
        %s340 = smul.addr %s339, 48
        %s341 = scalar_lea.vmem [#allocation6], %s340
        %p342 = pneg %p97
        %p343 = pneg %p94
        %p344 = pneg %p123
        %p345 = pneg %p120
        %p346 = scmp.lt.s32.totalorder %s24, 1
        %s347 = scalar_select %p346, %s24, 1
        %s348 = scalar_lea.vmem %s3, %s347
        %p349 = pneg %p149
        %p350 = pneg %p146
        %p351 = scmp.lt.s32.totalorder %s24, 1
        %s352 = scalar_select %p351, %s24, 1
        %s353 = scalar_lea.vmem %s4, %s352
        %p354 = pneg %p175
        %p355 = pneg %p172
        %p356 = scmp.lt.s32.totalorder %s24, 1
        %s357 = scalar_select %p356, %s24, 1
        %s358 = scalar_lea.vmem %s5, %s357
        %p359 = pneg %p201
        %p360 = pneg %p198
        %p361 = scmp.lt.s32.totalorder %s24, 1
        %s362 = scalar_select %p361, %s24, 1
        %s363 = scalar_lea.vmem %s6, %s362
        %p364 = scmp.lt.s32.totalorder %s24, 1
        %s365 = scalar_select %p364, %s24, 1
        %s366 = scalar_lea.vmem %s3, %s365
        %p367 = scmp.lt.s32.totalorder %s24, 1
        %s368 = scalar_select %p367, %s24, 1
        %s369 = scalar_lea.vmem %s4, %s368
        %p370 = scmp.lt.s32.totalorder %s24, 1
        %s371 = scalar_select %p370, %s24, 1
        %s372 = scalar_lea.vmem %s5, %s371
        %p373 = scmp.lt.s32.totalorder %s24, 1
        %s374 = scalar_select %p373, %s24, 1
        %s375 = scalar_lea.vmem %s6, %s374
        %v376 = vlaneseq
        %v377 = vshrl.u32 %v376, 7
        %v378 = vadd.s32 %v377, 8
        %vm379 = vcmp.eq.s32.totalorder %v377, 0
        %vm380 = vcmp.eq.s32.totalorder %v378, 0
        %v381 = vlaneseq
        %v382 = vand.u32 %v381, 127
        %vm383 = vcmp.eq.s32.totalorder %v382, 0
        %v384 = vld [vmem:[%s317] sm:$0xff]
        %v385 = vld [vmem:[%s317 + $0x8] sm:$0xff]
        %v386 = vld [vmem:[%s317 + $0x10] sm:$0xff]
        %v387 = vld [vmem:[%s317 + $0x18] sm:$0xff]
        %v388 = vld [vmem:[%s317 + $0x20] sm:$0xff]
        %v389 = vld [vmem:[%s317 + $0x28] sm:$0xff]
        %390 = vrot.lane.b32.xlu0 %v384, 1
        %v391 = vpop.permute.xlu0 %390
        %392 = vrot.lane.b32.xlu0 %v385, 1
        %v393 = vpop.permute.xlu0 %392
        %v394 = vsel %vm383, 0.0, %v391
        %v395 = vsel %vm383, 0.0, %v393
        %v396 = vrot.slane %v384, 7
        %v397 = vrot.slane %v385, 7
        %vm398 = vcmp.lt.s32.totalorder %v377, 1
        %v399 = vsel %vm398, %v396, %v397
        %v400 = vsel %vm398, %v397, %v396
        %v401 = vsel %vm379, 0.0, %v400
        %v402 = vsel %vm380, 0.0, %v399
        %v403 = vsub.f32 %v394, %v384
        %v404 = vsub.f32 %v395, %v385
        %v405 = vand.u32 2147483647, %v403
        %v406 = vand.u32 2147483647, %v404
        %v407 = vsub.f32 %v401, %v384
        %v408 = vsub.f32 %v402, %v385
        %v409 = vand.u32 2147483647, %v407
        %v410 = vand.u32 2147483647, %v408
        %v411 = vadd.f32 %v405, %v409
        %v412 = vadd.f32 %v406, %v410
        %413 = vrot.lane.b32.xlu0 %v386, 1
        %v414 = vpop.permute.xlu0 %413
        %415 = vrot.lane.b32.xlu0 %v387, 1
        %v416 = vpop.permute.xlu0 %415
        %v417 = vsel %vm383, 0.0, %v414
        %v418 = vsel %vm383, 0.0, %v416
        %v419 = vrot.slane %v386, 7
        %v420 = vrot.slane %v387, 7
        %v421 = vsel %vm398, %v419, %v420
        %v422 = vsel %vm398, %v420, %v419
        %v423 = vsel %vm379, 0.0, %v422
        %v424 = vsel %vm380, 0.0, %v421
        %v425 = vsub.f32 %v417, %v386
        %v426 = vsub.f32 %v418, %v387
        %v427 = vand.u32 2147483647, %v425
        %v428 = vand.u32 2147483647, %v426
        %v429 = vsub.f32 %v423, %v386
        %v430 = vsub.f32 %v424, %v387
        %v431 = vand.u32 2147483647, %v429
        %v432 = vand.u32 2147483647, %v430
        %v433 = vadd.f32 %v427, %v431
        %v434 = vadd.f32 %v428, %v432
        %435 = vrot.lane.b32.xlu0 %v388, 1
        %v436 = vpop.permute.xlu0 %435
        %437 = vrot.lane.b32.xlu0 %v389, 1
        %v438 = vpop.permute.xlu0 %437
        %v439 = vsel %vm383, 0.0, %v436
        %v440 = vsel %vm383, 0.0, %v438
        %v441 = vrot.slane %v388, 7
        %v442 = vrot.slane %v389, 7
        %v443 = vsel %vm398, %v441, %v442
        %v444 = vsel %vm398, %v442, %v441
        %v445 = vsel %vm379, 0.0, %v444
        %v446 = vsel %vm380, 0.0, %v443
        %v447 = vsub.f32 %v439, %v388
        %v448 = vsub.f32 %v440, %v389
        %v449 = vand.u32 2147483647, %v447
        %v450 = vand.u32 2147483647, %v448
        %v451 = vsub.f32 %v445, %v388
        %v452 = vsub.f32 %v446, %v389
        %v453 = vand.u32 2147483647, %v451
        %v454 = vand.u32 2147483647, %v452
        %v455 = vadd.f32 %v449, %v453
        %v456 = vadd.f32 %v450, %v454
        %v457 = vld [vmem:[%s307] sm:$0xff]
        %v458 = vld [vmem:[%s307 + $0x8] sm:$0xff]
        %v459 = vld [vmem:[%s307 + $0x10] sm:$0xff]
        %v460 = vld [vmem:[%s307 + $0x18] sm:$0xff]
        %v461 = vld [vmem:[%s307 + $0x20] sm:$0xff]
        %v462 = vld [vmem:[%s307 + $0x28] sm:$0xff]
        %v463 = vsub.f32 %v457, %v384
        %v464 = vsub.f32 %v458, %v385
        %v465 = vmul.f32 %v463, %v463
        %v466 = vmul.f32 %v464, %v464
        %v467 = vadd.f32 %v465, 0.0
        %v468 = vadd.f32 %v466, 0.0
        %469 = vrot.lane.b32.xlu0 %v457, 1
        %v470 = vpop.permute.xlu0 %469
        %471 = vrot.lane.b32.xlu0 %v458, 1
        %v472 = vpop.permute.xlu0 %471
        %v473 = vsel %vm383, 0.0, %v470
        %v474 = vsel %vm383, 0.0, %v472
        %v475 = vrot.slane %v457, 7
        %v476 = vrot.slane %v458, 7
        %v477 = vsel %vm398, %v475, %v476
        %v478 = vsel %vm398, %v476, %v475
        %v479 = vsel %vm379, 0.0, %v478
        %v480 = vsel %vm380, 0.0, %v477
        %v481 = vsub.f32 %v473, %v457
        %v482 = vsub.f32 %v474, %v458
        %v483 = vand.u32 2147483647, %v481
        %v484 = vand.u32 2147483647, %v482
        %v485 = vsub.f32 %v479, %v457
        %v486 = vsub.f32 %v480, %v458
        %v487 = vand.u32 2147483647, %v485
        %v488 = vand.u32 2147483647, %v486
        %v489 = vadd.f32 %v483, %v487
        %v490 = vadd.f32 %v484, %v488
        %v491 = vsub.f32 %v489, %v411
        %v492 = vsub.f32 %v490, %v412
        %v493 = vand.u32 2147483647, %v491
        %v494 = vand.u32 2147483647, %v492
        %v495 = vadd.f32 %v493, 0.0
        %v496 = vadd.f32 %v494, 0.0
        %v497 = vsub.f32 %v459, %v386
        %v498 = vsub.f32 %v460, %v387
        %v499 = vmul.f32 %v497, %v497
        %v500 = vmul.f32 %v498, %v498
        %v501 = vadd.f32 %v467, %v499
        %v502 = vadd.f32 %v468, %v500
        %503 = vrot.lane.b32.xlu0 %v459, 1
        %v504 = vpop.permute.xlu0 %503
        %505 = vrot.lane.b32.xlu0 %v460, 1
        %v506 = vpop.permute.xlu0 %505
        %v507 = vsel %vm383, 0.0, %v504
        %v508 = vsel %vm383, 0.0, %v506
        %v509 = vrot.slane %v459, 7
        %v510 = vrot.slane %v460, 7
        %v511 = vsel %vm398, %v509, %v510
        %v512 = vsel %vm398, %v510, %v509
        %v513 = vsel %vm379, 0.0, %v512
        %v514 = vsel %vm380, 0.0, %v511
        %v515 = vsub.f32 %v507, %v459
        %v516 = vsub.f32 %v508, %v460
        %v517 = vand.u32 2147483647, %v515
        %v518 = vand.u32 2147483647, %v516
        %v519 = vsub.f32 %v513, %v459
        %v520 = vsub.f32 %v514, %v460
        %v521 = vand.u32 2147483647, %v519
        %v522 = vand.u32 2147483647, %v520
        %v523 = vadd.f32 %v517, %v521
        %v524 = vadd.f32 %v518, %v522
        %v525 = vsub.f32 %v523, %v433
        %v526 = vsub.f32 %v524, %v434
        %v527 = vand.u32 2147483647, %v525
        %v528 = vand.u32 2147483647, %v526
        %v529 = vadd.f32 %v495, %v527
        %v530 = vadd.f32 %v496, %v528
        %v531 = vsub.f32 %v461, %v388
        %v532 = vsub.f32 %v462, %v389
        %v533 = vmul.f32 %v531, %v531
        %v534 = vmul.f32 %v532, %v532
        %v535 = vadd.f32 %v501, %v533
        %v536 = vadd.f32 %v502, %v534
        %537 = vrot.lane.b32.xlu0 %v461, 1
        %v538 = vpop.permute.xlu0 %537
        %539 = vrot.lane.b32.xlu0 %v462, 1
        %v540 = vpop.permute.xlu0 %539
        %v541 = vsel %vm383, 0.0, %v538
        %v542 = vsel %vm383, 0.0, %v540
        %v543 = vrot.slane %v461, 7
        %v544 = vrot.slane %v462, 7
        %v545 = vsel %vm398, %v543, %v544
        %v546 = vsel %vm398, %v544, %v543
        %v547 = vsel %vm379, 0.0, %v546
        %v548 = vsel %vm380, 0.0, %v545
        %v549 = vsub.f32 %v541, %v461
        %v550 = vsub.f32 %v542, %v462
        %v551 = vand.u32 2147483647, %v549
        %v552 = vand.u32 2147483647, %v550
        %v553 = vsub.f32 %v547, %v461
        %v554 = vsub.f32 %v548, %v462
        %v555 = vand.u32 2147483647, %v553
        %v556 = vand.u32 2147483647, %v554
        %v557 = vadd.f32 %v551, %v555
        %v558 = vadd.f32 %v552, %v556
        %v559 = vsub.f32 %v557, %v455
        %v560 = vsub.f32 %v558, %v456
        %v561 = vand.u32 2147483647, %v559
        %v562 = vand.u32 2147483647, %v560
        %v563 = vadd.f32 %v529, %v561
        %v564 = vadd.f32 %v530, %v562
        %v565 = vld [vmem:[%s297] sm:$0xff]
        %v566 = vld [vmem:[%s297 + $0x8] sm:$0xff]
        %v567 = vld [vmem:[%s297 + $0x10] sm:$0xff]
        %v568 = vld [vmem:[%s297 + $0x18] sm:$0xff]
        %v569 = vld [vmem:[%s297 + $0x20] sm:$0xff]
        %v570 = vld [vmem:[%s297 + $0x28] sm:$0xff]
        %v571 = vsub.f32 %v565, %v384
        %v572 = vsub.f32 %v566, %v385
        %v573 = vmul.f32 %v571, %v571
        %v574 = vmul.f32 %v572, %v572
        %v575 = vadd.f32 %v573, 0.0
        %v576 = vadd.f32 %v574, 0.0
        %577 = vrot.lane.b32.xlu0 %v565, 1
        %v578 = vpop.permute.xlu0 %577
        %579 = vrot.lane.b32.xlu0 %v566, 1
        %v580 = vpop.permute.xlu0 %579
        %v581 = vsel %vm383, 0.0, %v578
        %v582 = vsel %vm383, 0.0, %v580
        %v583 = vrot.slane %v565, 7
        %v584 = vrot.slane %v566, 7
        %v585 = vsel %vm398, %v583, %v584
        %v586 = vsel %vm398, %v584, %v583
        %v587 = vsel %vm379, 0.0, %v586
        %v588 = vsel %vm380, 0.0, %v585
        %v589 = vsub.f32 %v581, %v565
        %v590 = vsub.f32 %v582, %v566
        %v591 = vand.u32 2147483647, %v589
        %v592 = vand.u32 2147483647, %v590
        %v593 = vsub.f32 %v587, %v565
        %v594 = vsub.f32 %v588, %v566
        %v595 = vand.u32 2147483647, %v593
        %v596 = vand.u32 2147483647, %v594
        %v597 = vadd.f32 %v591, %v595
        %v598 = vadd.f32 %v592, %v596
        %v599 = vsub.f32 %v597, %v411
        %v600 = vsub.f32 %v598, %v412
        %v601 = vand.u32 2147483647, %v599
        %v602 = vand.u32 2147483647, %v600
        %v603 = vadd.f32 %v601, 0.0
        %v604 = vadd.f32 %v602, 0.0
        %v605 = vsub.f32 %v567, %v386
        %v606 = vsub.f32 %v568, %v387
        %v607 = vmul.f32 %v605, %v605
        %v608 = vmul.f32 %v606, %v606
        %v609 = vadd.f32 %v575, %v607
        %v610 = vadd.f32 %v576, %v608
        %611 = vrot.lane.b32.xlu0 %v567, 1
        %v612 = vpop.permute.xlu0 %611
        %613 = vrot.lane.b32.xlu0 %v568, 1
        %v614 = vpop.permute.xlu0 %613
        %v615 = vsel %vm383, 0.0, %v612
        %v616 = vsel %vm383, 0.0, %v614
        %v617 = vrot.slane %v567, 7
        %v618 = vrot.slane %v568, 7
        %v619 = vsel %vm398, %v617, %v618
        %v620 = vsel %vm398, %v618, %v617
        %v621 = vsel %vm379, 0.0, %v620
        %v622 = vsel %vm380, 0.0, %v619
        %v623 = vsub.f32 %v615, %v567
        %v624 = vsub.f32 %v616, %v568
        %v625 = vand.u32 2147483647, %v623
        %v626 = vand.u32 2147483647, %v624
        %v627 = vsub.f32 %v621, %v567
        %v628 = vsub.f32 %v622, %v568
        %v629 = vand.u32 2147483647, %v627
        %v630 = vand.u32 2147483647, %v628
        %v631 = vadd.f32 %v625, %v629
        %v632 = vadd.f32 %v626, %v630
        %v633 = vsub.f32 %v631, %v433
        %v634 = vsub.f32 %v632, %v434
        %v635 = vand.u32 2147483647, %v633
        %v636 = vand.u32 2147483647, %v634
        %v637 = vadd.f32 %v603, %v635
        %v638 = vadd.f32 %v604, %v636
        %v639 = vsub.f32 %v569, %v388
        %v640 = vsub.f32 %v570, %v389
        %v641 = vmul.f32 %v639, %v639
        %v642 = vmul.f32 %v640, %v640
        %v643 = vadd.f32 %v609, %v641
        %v644 = vadd.f32 %v610, %v642
        %645 = vrot.lane.b32.xlu0 %v569, 1
        %v646 = vpop.permute.xlu0 %645
        %647 = vrot.lane.b32.xlu0 %v570, 1
        %v648 = vpop.permute.xlu0 %647
        %v649 = vsel %vm383, 0.0, %v646
        %v650 = vsel %vm383, 0.0, %v648
        %v651 = vrot.slane %v569, 7
        %v652 = vrot.slane %v570, 7
        %v653 = vsel %vm398, %v651, %v652
        %v654 = vsel %vm398, %v652, %v651
        %v655 = vsel %vm379, 0.0, %v654
        %v656 = vsel %vm380, 0.0, %v653
        %v657 = vsub.f32 %v649, %v569
        %v658 = vsub.f32 %v650, %v570
        %v659 = vand.u32 2147483647, %v657
        %v660 = vand.u32 2147483647, %v658
        %v661 = vsub.f32 %v655, %v569
        %v662 = vsub.f32 %v656, %v570
        %v663 = vand.u32 2147483647, %v661
        %v664 = vand.u32 2147483647, %v662
        %v665 = vadd.f32 %v659, %v663
        %v666 = vadd.f32 %v660, %v664
        %v667 = vsub.f32 %v665, %v455
        %v668 = vsub.f32 %v666, %v456
        %v669 = vand.u32 2147483647, %v667
        %v670 = vand.u32 2147483647, %v668
        %v671 = vadd.f32 %v637, %v669
        %v672 = vadd.f32 %v638, %v670
        %s673 = scalar_lea.vmem %s297, 48 [#allocation2]
        %v674 = vld [vmem:[%s673] sm:$0xff]
        %v675 = vld [vmem:[%s673 + $0x8] sm:$0xff]
        %v676 = vld [vmem:[%s673 + $0x10] sm:$0xff]
        %v677 = vld [vmem:[%s673 + $0x18] sm:$0xff]
        %v678 = vld [vmem:[%s673 + $0x20] sm:$0xff]
        %v679 = vld [vmem:[%s673 + $0x28] sm:$0xff]
        %v680 = vsub.f32 %v674, %v384
        %v681 = vsub.f32 %v675, %v385
        %v682 = vmul.f32 %v680, %v680
        %v683 = vmul.f32 %v681, %v681
        %v684 = vadd.f32 %v643, %v682
        %v685 = vadd.f32 %v644, %v683
        %686 = vrot.lane.b32.xlu0 %v674, 1
        %v687 = vpop.permute.xlu0 %686
        %688 = vrot.lane.b32.xlu0 %v675, 1
        %v689 = vpop.permute.xlu0 %688
        %v690 = vsel %vm383, 0.0, %v687
        %v691 = vsel %vm383, 0.0, %v689
        %v692 = vrot.slane %v674, 7
        %v693 = vrot.slane %v675, 7
        %v694 = vsel %vm398, %v692, %v693
        %v695 = vsel %vm398, %v693, %v692
        %v696 = vsel %vm379, 0.0, %v695
        %v697 = vsel %vm380, 0.0, %v694
        %v698 = vsub.f32 %v690, %v674
        %v699 = vsub.f32 %v691, %v675
        %v700 = vand.u32 2147483647, %v698
        %v701 = vand.u32 2147483647, %v699
        %v702 = vsub.f32 %v696, %v674
        %v703 = vsub.f32 %v697, %v675
        %v704 = vand.u32 2147483647, %v702
        %v705 = vand.u32 2147483647, %v703
        %v706 = vadd.f32 %v700, %v704
        %v707 = vadd.f32 %v701, %v705
        %v708 = vsub.f32 %v706, %v411
        %v709 = vsub.f32 %v707, %v412
        %v710 = vand.u32 2147483647, %v708
        %v711 = vand.u32 2147483647, %v709
        %v712 = vadd.f32 %v671, %v710
        %v713 = vadd.f32 %v672, %v711
        %v714 = vsub.f32 %v676, %v386
        %v715 = vsub.f32 %v677, %v387
        %v716 = vmul.f32 %v714, %v714
        %v717 = vmul.f32 %v715, %v715
        %v718 = vadd.f32 %v684, %v716
        %v719 = vadd.f32 %v685, %v717
        %720 = vrot.lane.b32.xlu0 %v676, 1
        %v721 = vpop.permute.xlu0 %720
        %722 = vrot.lane.b32.xlu0 %v677, 1
        %v723 = vpop.permute.xlu0 %722
        %v724 = vsel %vm383, 0.0, %v721
        %v725 = vsel %vm383, 0.0, %v723
        %v726 = vrot.slane %v676, 7
        %v727 = vrot.slane %v677, 7
        %v728 = vsel %vm398, %v726, %v727
        %v729 = vsel %vm398, %v727, %v726
        %v730 = vsel %vm379, 0.0, %v729
        %v731 = vsel %vm380, 0.0, %v728
        %v732 = vsub.f32 %v724, %v676
        %v733 = vsub.f32 %v725, %v677
        %v734 = vand.u32 2147483647, %v732
        %v735 = vand.u32 2147483647, %v733
        %v736 = vsub.f32 %v730, %v676
        %v737 = vsub.f32 %v731, %v677
        %v738 = vand.u32 2147483647, %v736
        %v739 = vand.u32 2147483647, %v737
        %v740 = vadd.f32 %v734, %v738
        %v741 = vadd.f32 %v735, %v739
        %v742 = vsub.f32 %v740, %v433
        %v743 = vsub.f32 %v741, %v434
        %v744 = vand.u32 2147483647, %v742
        %v745 = vand.u32 2147483647, %v743
        %v746 = vadd.f32 %v712, %v744
        %v747 = vadd.f32 %v713, %v745
        %v748 = vsub.f32 %v678, %v388
        %v749 = vsub.f32 %v679, %v389
        %v750 = vmul.f32 %v748, %v748
        %v751 = vmul.f32 %v749, %v749
        %v752 = vadd.f32 %v718, %v750
        %v753 = vadd.f32 %v719, %v751
        %754 = vrot.lane.b32.xlu0 %v678, 1
        %v755 = vpop.permute.xlu0 %754
        %756 = vrot.lane.b32.xlu0 %v679, 1
        %v757 = vpop.permute.xlu0 %756
        %v758 = vsel %vm383, 0.0, %v755
        %v759 = vsel %vm383, 0.0, %v757
        %v760 = vrot.slane %v678, 7
        %v761 = vrot.slane %v679, 7
        %v762 = vsel %vm398, %v760, %v761
        %v763 = vsel %vm398, %v761, %v760
        %v764 = vsel %vm379, 0.0, %v763
        %v765 = vsel %vm380, 0.0, %v762
        %v766 = vsub.f32 %v758, %v678
        %v767 = vsub.f32 %v759, %v679
        %v768 = vand.u32 2147483647, %v766
        %v769 = vand.u32 2147483647, %v767
        %v770 = vsub.f32 %v764, %v678
        %v771 = vsub.f32 %v765, %v679
        %v772 = vand.u32 2147483647, %v770
        %v773 = vand.u32 2147483647, %v771
        %v774 = vadd.f32 %v768, %v772
        %v775 = vadd.f32 %v769, %v773
        %v776 = vsub.f32 %v774, %v455
        %v777 = vsub.f32 %v775, %v456
        %v778 = vand.u32 2147483647, %v776
        %v779 = vand.u32 2147483647, %v777
        %v780 = vadd.f32 %v746, %v778
        %v781 = vadd.f32 %v747, %v779
        %s782 = scalar_lea.vmem %s297, 96 [#allocation2]
        %v783 = vld [vmem:[%s782] sm:$0xff]
        %v784 = vld [vmem:[%s782 + $0x8] sm:$0xff]
        %v785 = vld [vmem:[%s782 + $0x10] sm:$0xff]
        %v786 = vld [vmem:[%s782 + $0x18] sm:$0xff]
        %v787 = vld [vmem:[%s782 + $0x20] sm:$0xff]
        %v788 = vld [vmem:[%s782 + $0x28] sm:$0xff]
        %v789 = vsub.f32 %v783, %v384
        %v790 = vsub.f32 %v784, %v385
        %v791 = vmul.f32 %v789, %v789
        %v792 = vmul.f32 %v790, %v790
        %v793 = vadd.f32 %v752, %v791
        %v794 = vadd.f32 %v753, %v792
        %795 = vrot.lane.b32.xlu0 %v783, 1
        %v796 = vpop.permute.xlu0 %795
        %797 = vrot.lane.b32.xlu0 %v784, 1
        %v798 = vpop.permute.xlu0 %797
        %v799 = vsel %vm383, 0.0, %v796
        %v800 = vsel %vm383, 0.0, %v798
        %v801 = vrot.slane %v783, 7
        %v802 = vrot.slane %v784, 7
        %v803 = vsel %vm398, %v801, %v802
        %v804 = vsel %vm398, %v802, %v801
        %v805 = vsel %vm379, 0.0, %v804
        %v806 = vsel %vm380, 0.0, %v803
        %v807 = vsub.f32 %v799, %v783
        %v808 = vsub.f32 %v800, %v784
        %v809 = vand.u32 2147483647, %v807
        %v810 = vand.u32 2147483647, %v808
        %v811 = vsub.f32 %v805, %v783
        %v812 = vsub.f32 %v806, %v784
        %v813 = vand.u32 2147483647, %v811
        %v814 = vand.u32 2147483647, %v812
        %v815 = vadd.f32 %v809, %v813
        %v816 = vadd.f32 %v810, %v814
        %v817 = vsub.f32 %v815, %v411
        %v818 = vsub.f32 %v816, %v412
        %v819 = vand.u32 2147483647, %v817
        %v820 = vand.u32 2147483647, %v818
        %v821 = vadd.f32 %v780, %v819
        %v822 = vadd.f32 %v781, %v820
        %v823 = vsub.f32 %v785, %v386
        %v824 = vsub.f32 %v786, %v387
        %v825 = vmul.f32 %v823, %v823
        %v826 = vmul.f32 %v824, %v824
        %v827 = vadd.f32 %v793, %v825
        %v828 = vadd.f32 %v794, %v826
        %829 = vrot.lane.b32.xlu0 %v785, 1
        %v830 = vpop.permute.xlu0 %829
        %831 = vrot.lane.b32.xlu0 %v786, 1
        %v832 = vpop.permute.xlu0 %831
        %v833 = vsel %vm383, 0.0, %v830
        %v834 = vsel %vm383, 0.0, %v832
        %v835 = vrot.slane %v785, 7
        %v836 = vrot.slane %v786, 7
        %v837 = vsel %vm398, %v835, %v836
        %v838 = vsel %vm398, %v836, %v835
        %v839 = vsel %vm379, 0.0, %v838
        %v840 = vsel %vm380, 0.0, %v837
        %v841 = vsub.f32 %v833, %v785
        %v842 = vsub.f32 %v834, %v786
        %v843 = vand.u32 2147483647, %v841
        %v844 = vand.u32 2147483647, %v842
        %v845 = vsub.f32 %v839, %v785
        %v846 = vsub.f32 %v840, %v786
        %v847 = vand.u32 2147483647, %v845
        %v848 = vand.u32 2147483647, %v846
        %v849 = vadd.f32 %v843, %v847
        %v850 = vadd.f32 %v844, %v848
        %v851 = vsub.f32 %v849, %v433
        %v852 = vsub.f32 %v850, %v434
        %v853 = vand.u32 2147483647, %v851
        %v854 = vand.u32 2147483647, %v852
        %v855 = vadd.f32 %v821, %v853
        %v856 = vadd.f32 %v822, %v854
        %v857 = vsub.f32 %v787, %v388
        %v858 = vsub.f32 %v788, %v389
        %v859 = vmul.f32 %v857, %v857
        %v860 = vmul.f32 %v858, %v858
        %v861 = vadd.f32 %v827, %v859
        %v862 = vadd.f32 %v828, %v860
        %863 = vrot.lane.b32.xlu0 %v787, 1
        %v864 = vpop.permute.xlu0 %863
        %865 = vrot.lane.b32.xlu0 %v788, 1
        %v866 = vpop.permute.xlu0 %865
        %v867 = vsel %vm383, 0.0, %v864
        %v868 = vsel %vm383, 0.0, %v866
        %v869 = vrot.slane %v787, 7
        %v870 = vrot.slane %v788, 7
        %v871 = vsel %vm398, %v869, %v870
        %v872 = vsel %vm398, %v870, %v869
        %v873 = vsel %vm379, 0.0, %v872
        %v874 = vsel %vm380, 0.0, %v871
        %v875 = vsub.f32 %v867, %v787
        %v876 = vsub.f32 %v868, %v788
        %v877 = vand.u32 2147483647, %v875
        %v878 = vand.u32 2147483647, %v876
        %v879 = vsub.f32 %v873, %v787
        %v880 = vsub.f32 %v874, %v788
        %v881 = vand.u32 2147483647, %v879
        %v882 = vand.u32 2147483647, %v880
        %v883 = vadd.f32 %v877, %v881
        %v884 = vadd.f32 %v878, %v882
        %v885 = vsub.f32 %v883, %v455
        %v886 = vsub.f32 %v884, %v456
        %v887 = vand.u32 2147483647, %v885
        %v888 = vand.u32 2147483647, %v886
        %v889 = vadd.f32 %v855, %v887
        %v890 = vadd.f32 %v856, %v888
        %s891 = scalar_lea.vmem %s297, 144 [#allocation2]
        %v892 = vld [vmem:[%s891] sm:$0xff]
        %v893 = vld [vmem:[%s891 + $0x8] sm:$0xff]
        %v894 = vld [vmem:[%s891 + $0x10] sm:$0xff]
        %v895 = vld [vmem:[%s891 + $0x18] sm:$0xff]
        %v896 = vld [vmem:[%s891 + $0x20] sm:$0xff]
        %v897 = vld [vmem:[%s891 + $0x28] sm:$0xff]
        %v898 = vsub.f32 %v892, %v384
        %v899 = vsub.f32 %v893, %v385
        %v900 = vmul.f32 %v898, %v898
        %v901 = vmul.f32 %v899, %v899
        %v902 = vadd.f32 %v861, %v900
        %v903 = vadd.f32 %v862, %v901
        %904 = vrot.lane.b32.xlu0 %v892, 1
        %v905 = vpop.permute.xlu0 %904
        %906 = vrot.lane.b32.xlu0 %v893, 1
        %v907 = vpop.permute.xlu0 %906
        %v908 = vsel %vm383, 0.0, %v905
        %v909 = vsel %vm383, 0.0, %v907
        %v910 = vrot.slane %v892, 7
        %v911 = vrot.slane %v893, 7
        %v912 = vsel %vm398, %v910, %v911
        %v913 = vsel %vm398, %v911, %v910
        %v914 = vsel %vm379, 0.0, %v913
        %v915 = vsel %vm380, 0.0, %v912
        %v916 = vsub.f32 %v908, %v892
        %v917 = vsub.f32 %v909, %v893
        %v918 = vand.u32 2147483647, %v916
        %v919 = vand.u32 2147483647, %v917
        %v920 = vsub.f32 %v914, %v892
        %v921 = vsub.f32 %v915, %v893
        %v922 = vand.u32 2147483647, %v920
        %v923 = vand.u32 2147483647, %v921
        %v924 = vadd.f32 %v918, %v922
        %v925 = vadd.f32 %v919, %v923
        %v926 = vsub.f32 %v924, %v411
        %v927 = vsub.f32 %v925, %v412
        %v928 = vand.u32 2147483647, %v926
        %v929 = vand.u32 2147483647, %v927
        %v930 = vadd.f32 %v889, %v928
        %v931 = vadd.f32 %v890, %v929
        %v932 = vsub.f32 %v894, %v386
        %v933 = vsub.f32 %v895, %v387
        %v934 = vmul.f32 %v932, %v932
        %v935 = vmul.f32 %v933, %v933
        %v936 = vadd.f32 %v902, %v934
        %v937 = vadd.f32 %v903, %v935
        %938 = vrot.lane.b32.xlu0 %v894, 1
        %v939 = vpop.permute.xlu0 %938
        %940 = vrot.lane.b32.xlu0 %v895, 1
        %v941 = vpop.permute.xlu0 %940
        %v942 = vsel %vm383, 0.0, %v939
        %v943 = vsel %vm383, 0.0, %v941
        %v944 = vrot.slane %v894, 7
        %v945 = vrot.slane %v895, 7
        %v946 = vsel %vm398, %v944, %v945
        %v947 = vsel %vm398, %v945, %v944
        %v948 = vsel %vm379, 0.0, %v947
        %v949 = vsel %vm380, 0.0, %v946
        %v950 = vsub.f32 %v942, %v894
        %v951 = vsub.f32 %v943, %v895
        %v952 = vand.u32 2147483647, %v950
        %v953 = vand.u32 2147483647, %v951
        %v954 = vsub.f32 %v948, %v894
        %v955 = vsub.f32 %v949, %v895
        %v956 = vand.u32 2147483647, %v954
        %v957 = vand.u32 2147483647, %v955
        %v958 = vadd.f32 %v952, %v956
        %v959 = vadd.f32 %v953, %v957
        %v960 = vsub.f32 %v958, %v433
        %v961 = vsub.f32 %v959, %v434
        %v962 = vand.u32 2147483647, %v960
        %v963 = vand.u32 2147483647, %v961
        %v964 = vadd.f32 %v930, %v962
        %v965 = vadd.f32 %v931, %v963
        %v966 = vsub.f32 %v896, %v388
        %v967 = vsub.f32 %v897, %v389
        %v968 = vmul.f32 %v966, %v966
        %v969 = vmul.f32 %v967, %v967
        %v970 = vadd.f32 %v936, %v968
        %v971 = vadd.f32 %v937, %v969
        %972 = vrot.lane.b32.xlu0 %v896, 1
        %v973 = vpop.permute.xlu0 %972
        %974 = vrot.lane.b32.xlu0 %v897, 1
        %v975 = vpop.permute.xlu0 %974
        %v976 = vsel %vm383, 0.0, %v973
        %v977 = vsel %vm383, 0.0, %v975
        %v978 = vrot.slane %v896, 7
        %v979 = vrot.slane %v897, 7
        %v980 = vsel %vm398, %v978, %v979
        %v981 = vsel %vm398, %v979, %v978
        %v982 = vsel %vm379, 0.0, %v981
        %v983 = vsel %vm380, 0.0, %v980
        %v984 = vsub.f32 %v976, %v896
        %v985 = vsub.f32 %v977, %v897
        %v986 = vand.u32 2147483647, %v984
        %v987 = vand.u32 2147483647, %v985
        %v988 = vsub.f32 %v982, %v896
        %v989 = vsub.f32 %v983, %v897
        %v990 = vand.u32 2147483647, %v988
        %v991 = vand.u32 2147483647, %v989
        %v992 = vadd.f32 %v986, %v990
        %v993 = vadd.f32 %v987, %v991
        %v994 = vsub.f32 %v992, %v455
        %v995 = vsub.f32 %v993, %v456
        %v996 = vand.u32 2147483647, %v994
        %v997 = vand.u32 2147483647, %v995
        %v998 = vadd.f32 %v964, %v996
        %v999 = vadd.f32 %v965, %v997
        %v1000 = vadd.f32 %v535, %v536
        %1001 = vadd.xlane.f32.xlu0 %v1000
        %v1002 = vpop.xlane.xlu0 %1001
        %v1003 = vrot.slane %v1002, 4
        %v1004 = vadd.f32 %v1002, %v1003
        %v1005 = vrot.slane %v1004, 2
        %v1006 = vadd.f32 %v1004, %v1005
        %v1007 = vrot.slane %v1006, 1
        %v1008 = vadd.f32 %v1006, %v1007
        %s1009 = vtos %v1008
        %v1010 = vstv %s1009
        %v1011 = vadd.f32 %v1010, 0.0
        %vm1012 = vcmask 0
        %1013 = vst.msk [vmem:[%s366] sm:$0x1] %vm1012, %v1011
        %v1014 = vadd.f32 %v563, %v564
        %1015 = vadd.xlane.f32.xlu0 %v1014
        %v1016 = vpop.xlane.xlu0 %1015
        %v1017 = vrot.slane %v1016, 4
        %v1018 = vadd.f32 %v1016, %v1017
        %v1019 = vrot.slane %v1018, 2
        %v1020 = vadd.f32 %v1018, %v1019
        %v1021 = vrot.slane %v1020, 1
        %v1022 = vadd.f32 %v1020, %v1021
        %s1023 = vtos %v1022
        %v1024 = vstv %s1023
        %v1025 = vadd.f32 %v1024, 0.0
        %1026 = vst.msk [vmem:[%s369] sm:$0x1] %vm1012, %v1025
        %v1027 = vadd.f32 %v970, %v971
        %1028 = vadd.xlane.f32.xlu0 %v1027
        %v1029 = vpop.xlane.xlu0 %1028
        %v1030 = vrot.slane %v1029, 4
        %v1031 = vadd.f32 %v1029, %v1030
        %v1032 = vrot.slane %v1031, 2
        %v1033 = vadd.f32 %v1031, %v1032
        %v1034 = vrot.slane %v1033, 1
        %v1035 = vadd.f32 %v1033, %v1034
        %s1036 = vtos %v1035
        %v1037 = vstv %s1036
        %v1038 = vadd.f32 %v1037, 0.0
        %1039 = vst.msk [vmem:[%s372] sm:$0x1] %vm1012, %v1038
        %v1040 = vadd.f32 %v998, %v999
        %1041 = vadd.xlane.f32.xlu0 %v1040
        %v1042 = vpop.xlane.xlu0 %1041
        %v1043 = vrot.slane %v1042, 4
        %v1044 = vadd.f32 %v1042, %v1043
        %v1045 = vrot.slane %v1044, 2
        %v1046 = vadd.f32 %v1044, %v1045
        %v1047 = vrot.slane %v1046, 1
        %v1048 = vadd.f32 %v1046, %v1047
        %s1049 = vtos %v1048
        %v1050 = vstv %s1049
        %v1051 = vadd.f32 %v1050, 0.0
        %1052 = vst.msk [vmem:[%s375] sm:$0x1] %vm1012, %v1051
        %p1053 = scmp.lt.s32.totalorder %s24, 1
        %s1054 = scalar_select %p1053, %s24, 1
        %s1055 = scalar_lea.vmem %s3, %s1054
        %p1056 = scmp.lt.s32.totalorder %s24, 1
        %s1057 = scalar_select %p1056, %s24, 1
        %s1058 = scalar_lea.vmem %s4, %s1057
        %p1059 = scmp.lt.s32.totalorder %s24, 1
        %s1060 = scalar_select %p1059, %s24, 1
        %s1061 = scalar_lea.vmem %s5, %s1060
        %p1062 = scmp.lt.s32.totalorder %s24, 1
        %s1063 = scalar_select %p1062, %s24, 1
        %s1064 = scalar_lea.vmem %s6, %s1063
        // Predicated region
        $region45: #{loss_func_forward.1} parent=31 // pred_check
          %p1065 = pneg %p120
        $region46: #{loss_func_forward.1} parent=31 // pred_check_branch
          %1067 = sbr.rel (%p1065) target = $region48
        $region47: #{loss_func_forward.1} parent=31 // pred_region
          _
        $region48: #{loss_func_forward.1} parent=31 // pred_fallthru
          _
        // Predicated region
        $region49: #{loss_func_forward.1} parent=31 // pred_check
          %p1068 = pneg %p146
        $region50: #{loss_func_forward.1} parent=31 // pred_check_branch
          %1070 = sbr.rel (%p1068) target = $region52
        $region51: #{loss_func_forward.1} parent=31 // pred_region
          _
        $region52: #{loss_func_forward.1} parent=31 // pred_fallthru
          _
        // Predicated region
        $region53: #{loss_func_forward.1} parent=31 // pred_check
          %p1071 = pneg %p172
        $region54: #{loss_func_forward.1} parent=31 // pred_check_branch
          %1073 = sbr.rel (%p1071) target = $region56
        $region55: #{loss_func_forward.1} parent=31 // pred_region
          _
        $region56: #{loss_func_forward.1} parent=31 // pred_fallthru
          _
        // Predicated region
        $region57: #{loss_func_forward.1} parent=31 // pred_check
          %p1074 = pneg %p198
        $region58: #{loss_func_forward.1} parent=31 // pred_check_branch
          %1076 = sbr.rel (%p1074) target = $region60
        $region59: #{loss_func_forward.1} parent=31 // pred_region
          _
        $region60: #{loss_func_forward.1} parent=31 // pred_fallthru
          _
      $region32: #{loss_func_forward.1} parent=5 // pred_fallthru
        _
      %p1077 = scmp.le.s32.totalorder 2, %s19
      // Predicated region
      $region61: #{loss_func_forward.1} parent=5 // pred_check
        %p1078 = pneg %p1077
      $region62: #{loss_func_forward.1} parent=5 // pred_check_branch
        %1080 = sbr.rel (%p1078) target = $region64
      $region63: #{loss_func_forward.1} parent=5 // pred_region
        %s1081 = ssub.s32 %s19, 2
        // Predicated region
        $region65: #{loss_func_forward.1} parent=63 // pred_check
          %p1082 = pneg %p126
        $region66: #{loss_func_forward.1} parent=63 // pred_check_branch
          %1084 = sbr.rel (%p1082) target = $region68
        $region67: #{loss_func_forward.1} parent=63 // pred_region
          %p1085 = scmp.lt.s32.totalorder %s25, 1
          %s1086 = scalar_select %p1085, %s25, 1
          %s1087 = scalar_lea.vmem %s3, %s1086
        $region68: #{loss_func_forward.1} parent=63 // pred_fallthru
          _
        // Predicated region
        $region69: #{loss_func_forward.1} parent=63 // pred_check
          %p1088 = pneg %p152
        $region70: #{loss_func_forward.1} parent=63 // pred_check_branch
          %1090 = sbr.rel (%p1088) target = $region72
        $region71: #{loss_func_forward.1} parent=63 // pred_region
          %p1091 = scmp.lt.s32.totalorder %s25, 1
          %s1092 = scalar_select %p1091, %s25, 1
          %s1093 = scalar_lea.vmem %s4, %s1092
        $region72: #{loss_func_forward.1} parent=63 // pred_fallthru
          _
        // Predicated region
        $region73: #{loss_func_forward.1} parent=63 // pred_check
          %p1094 = pneg %p178
        $region74: #{loss_func_forward.1} parent=63 // pred_check_branch
          %1096 = sbr.rel (%p1094) target = $region76
        $region75: #{loss_func_forward.1} parent=63 // pred_region
          %p1097 = scmp.lt.s32.totalorder %s25, 1
          %s1098 = scalar_select %p1097, %s25, 1
          %s1099 = scalar_lea.vmem %s5, %s1098
        $region76: #{loss_func_forward.1} parent=63 // pred_fallthru
          _
        // Predicated region
        $region77: #{loss_func_forward.1} parent=63 // pred_check
          %p1100 = pneg %p204
        $region78: #{loss_func_forward.1} parent=63 // pred_check_branch
          %1102 = sbr.rel (%p1100) target = $region80
        $region79: #{loss_func_forward.1} parent=63 // pred_region
          %p1103 = scmp.lt.s32.totalorder %s25, 1
          %s1104 = scalar_select %p1103, %s25, 1
          %s1105 = scalar_lea.vmem %s6, %s1104
        $region80: #{loss_func_forward.1} parent=63 // pred_fallthru
          _
      $region64: #{loss_func_forward.1} parent=5 // pred_fallthru
        _
    $region6: #{loss_func_forward.1} parent=1 // loop_footer
      %s23 = sadd.s32 1, %s19
    $region7: #{loss_func_forward.1} parent=1 // loop_footer_branch
      %18 = sbr.rel target = $region3
    $region8: #{loss_func_forward.1} parent=1 // loop_exit
      _
    %1106 = vsyncpa [#allocation3], 1
    %s1107 = scalar_lea.sflag [#allocation3], 1
    %1108 = vsyncpa %s1107, 1
    %1109 = vsyncpa [#allocation5], 1
    %s1110 = scalar_lea.sflag [#allocation5], 1
    %1111 = vsyncpa %s1110, 1

</llo_original>
